<compile_context>
chip_gen: v6e
topology: v6e:2x2x1
jax: 0.10.0
libtpu: 0.0.40
codegen_flags: <defaults>
</compile_context>

<pallas_src>
import numpy as np
import jax
import jax.numpy as jnp
from jax.experimental import pallas as pl
from jax.experimental.pallas import tpu as pltpu


# ----------------------------------------------------------------------------
# Static index tables for the "nested" im2col, block-diagonal form.
# p1 row (within an image-tile) = s*Bt + b_local, s = oh2*4 + ow2 (conv2 pos).
# p1 column = p*25 + k, p = i*5 + j (conv2 kernel offset), k = ki*5 + kj
# (conv1 kernel offset, Cin = 1).
# Element = x[b, 2*(2*oh2 + i) + ki, 2*(2*ow2 + j) + kj]  (stride-2, no pad).
# ----------------------------------------------------------------------------
_S_OH = np.repeat(np.arange(4), 4)          # oh2 per s
_S_OW = np.tile(np.arange(4), 4)            # ow2 per s
_P_I = np.repeat(np.arange(5), 5)           # i  per p
_P_J = np.tile(np.arange(5), 5)             # j  per p
_K_I = np.repeat(np.arange(5), 5)           # ki per k
_K_J = np.tile(np.arange(5), 5)             # kj per k
_IDX_R = (4 * _S_OH[:, None, None] + 2 * _P_I[None, :, None]
          + _K_I[None, None, :])            # (16, 25, 25) input row index
_IDX_C = (4 * _S_OW[:, None, None] + 2 * _P_J[None, :, None]
          + _K_J[None, None, :])            # (16, 25, 25) input col index


def _mnist_fused_kernel(p1_ref, w1_ref, b1_ref, w2_ref, b2_ref, wf_ref, bf_ref,
                        o_ref):
    """One grid step == Bt images. Everything stays in VMEM."""
    f32, bf16 = jnp.float32, jnp.bfloat16
    bt = o_ref.shape[0]                       # images per tile (static)

    # conv1, block-diagonal over the 25 conv2 offsets:
    #   (16*Bt, 640) @ (640, 128) -> lanes = (p, cin); + bias; SquareAct.
    y1 = jnp.dot(p1_ref[...], w1_ref[...], preferred_element_type=f32)
    y1 = y1 + b1_ref[...]
    y1 = y1 * y1                              # f32 square; padded lanes stay 0
    y1 = y1.astype(bf16)

    # conv2: ONE packed matmul (real K = 125 of 128), + bias, flatten+SquareAct.
    y2 = jnp.dot(y1, w2_ref[...], preferred_element_type=f32)
    y2 = y2 + b2_ref[...]
    y2 = y2 * y2                              # f32; padded lanes stay 0

    # fc1: rows are s-major (row = s*Bt + b_local), so each spatial position is
    # a contiguous tile-aligned (Bt,128) block; lane-concat them into (Bt,2048)
    # and do one f32 matmul (torch (C,H,W) flatten order is baked into wf_ref).
    y2_flat = jnp.concatenate(
        [y2[s * bt:(s + 1) * bt, :] for s in range(16)], axis=1)
    logits = jnp.dot(y2_flat, wf_ref[...], preferred_element_type=f32)
    o_ref[...] = logits + bf_ref[...]         # (Bt, 128); cols >= 10 are 0


def _mnist_fused_call(p1, w1p, b1p, w2p, b2p, wfp, bfp, b_pad, bt):
    nb = b_pad // bt
    rows = 16 * bt
    flops = 2 * b_pad * (16 * 640 * 128 + 16 * 128 * 128 + 2048 * 128)
    bytes_accessed = (p1.size * 2 + w1p.size * 2 + w2p.size * 2 + wfp.size * 4
                      + (b1p.size + b2p.size + bfp.size) * 4 + b_pad * 128 * 4)
    return pl.pallas_call(
        _mnist_fused_kernel,
        out_shape=jax.ShapeDtypeStruct((b_pad, 128), jnp.float32),
        grid=(nb,),
        in_specs=[
            pl.BlockSpec((rows, 640), lambda g: (g, 0)),     # per-tile patches
            pl.BlockSpec((640, 128), lambda g: (0, 0)),      # conv1 w (blkdiag)
            pl.BlockSpec((1, 128), lambda g: (0, 0)),        # conv1 b (tiled)
            pl.BlockSpec((128, 128), lambda g: (0, 0)),      # conv2 w (packed)
            pl.BlockSpec((1, 128), lambda g: (0, 0)),        # conv2 b
            pl.BlockSpec((2048, 128), lambda g: (0, 0)),     # fc1 w (flattened)
            pl.BlockSpec((1, 128), lambda g: (0, 0)),        # fc1 b
        ],
        out_specs=pl.BlockSpec((bt, 128), lambda g: (g, 0)),
        compiler_params=pltpu.CompilerParams(dimension_semantics=("parallel",)),
        cost_estimate=pl.CostEstimate(flops=flops, transcendentals=0,
                                      bytes_accessed=bytes_accessed),
    )(p1, w1p, b1p, w2p, b2p, wfp, bfp)


def prepare_params(params):
    """One-time weight re-layout + padding + casts (outside the forward path)."""
    f32, bf16 = jnp.float32, jnp.bfloat16

    # conv1: (Cout=5, Cin=1, 5, 5) -> (k=25, c=5), block-diag over the 25 conv2
    # offsets -> (625, 125), padded to (640, 128), bf16.
    w1_small = params["conv1_w"].reshape(5, 25).T
    w1_blk = jnp.kron(jnp.eye(25, dtype=f32), w1_small)            # (625, 125)
    w1p = jnp.zeros((640, 128), f32).at[:625, :125].set(w1_blk).astype(bf16)
    b1p = jnp.zeros((1, 128), f32).at[0, :125].set(jnp.tile(params["conv1_b"], 25))

    # conv2: (50, 5, 5, 5) -> (kh, kw, cin, cout) -> rows (p*5 + cin) = 125,
    # padded to (128, 128), bf16.
    w2 = jnp.transpose(params["conv2_w"], (2, 3, 1, 0)).reshape(125, 50)
    w2p = jnp.zeros((128, 128), f32).at[:125, :50].set(w2).astype(bf16)
    b2p = jnp.zeros((1, 128), f32).at[0, :50].set(params["conv2_b"])

    # fc1: torch flat index = c*16 + s  ->  rows s*128 + c, cols n; kept f32.
    wf = jnp.transpose(params["fc1_w"].reshape(10, 50, 16), (2, 1, 0))  # (s,c,n)
    wfp = jnp.zeros((16, 128, 128), f32).at[:, :50, :10].set(wf).reshape(2048, 128)
    bfp = jnp.zeros((1, 128), f32).at[0, :10].set(params["fc1_b"])

    return {"w1": w1p, "b1": b1p, "w2": w2p, "b2": b2p, "wf": wfp, "bf": bfp}


def _choose_bt(batch):
    if batch <= 8:
        return 8
    if batch < 32:
        return 8        # keeps the grid >= 2 so both v7x TensorCores get work
    return 16           # M = 256 rows per conv matmul (v6e/v7x 256-wide MXU)


@jax.jit
def mnist_forward(x_nchw, prepped):
    B = x_nchw.shape[0]
    bt = _choose_bt(B)
    b_pad = -(-B // bt) * bt
    nb = b_pad // bt

    x2d = x_nchw[:, 0, :, :].astype(jnp.float32)          # Cin = 1
    patches = x2d[:, _IDX_R, _IDX_C]                       # (B, 16, 25, 25)
    p1 = patches.reshape(B, 16, 625)
    if b_pad != B:
        p1 = jnp.pad(p1, ((0, b_pad - B), (0, 0), (0, 0)))
    # Row layout per tile: row = s*Bt + b_local (s-major -> contiguous fc1 slices).
    p1 = p1.reshape(nb, bt, 16, 625).transpose(0, 2, 1, 3).reshape(nb * 16 * bt, 625)
    p1 = jnp.pad(p1, ((0, 0), (0, 15))).astype(jnp.bfloat16)   # 625 -> 640 lanes

    out = _mnist_fused_call(p1, prepped["w1"], prepped["b1"], prepped["w2"],
                            prepped["b2"], prepped["wf"], prepped["bf"],
                            b_pad, bt)
    return out[:B, :10]


def mnist_reference(x_nchw, params):
    """Pure-JAX f32 reference of the torch forward (for validation only)."""
    dn = ("NCHW", "OIHW", "NCHW")
    y = jax.lax.conv_general_dilated(x_nchw, params["conv1_w"], (2, 2), "VALID",
                                     dimension_numbers=dn)
    y = y + params["conv1_b"][None, :, None, None]
    y = y * y
    y = jax.lax.conv_general_dilated(y, params["conv2_w"], (2, 2), "VALID",
                                     dimension_numbers=dn)
    y = y + params["conv2_b"][None, :, None, None]
    y = y.reshape(y.shape[0], -1)
    y = y * y
    return y @ params["fc1_w"].T + params["fc1_b"]


def init_params(key):
    """Deterministic synthetic init (PyTorch-default-style uniform bounds)."""
    ks = jax.random.split(key, 6)

    def u(k, shape, fan_in):
        bound = 1.0 / (fan_in ** 0.5)
        return jax.random.uniform(k, shape, jnp.float32, -bound, bound)

    return {
        "conv1_w": u(ks[0], (5, 1, 5, 5), 1 * 5 * 5),
        "conv1_b": u(ks[1], (5,), 1 * 5 * 5),
        "conv2_w": u(ks[2], (50, 5, 5, 5), 5 * 5 * 5),
        "conv2_b": u(ks[3], (50,), 5 * 5 * 5),
        "fc1_w": u(ks[4], (10, 800), 800),
        "fc1_b": u(ks[5], (10,), 800),
    }


if __name__ == "__main__":
    key = jax.random.PRNGKey(0)
    kx, kp = jax.random.split(key)
    params = init_params(kp)
    prepped = prepare_params(params)

    # MNIST geometry (28x28, 1 channel) is forced by fc1's in_features=800.
    x = jax.random.normal(kx, (2, 1, 28, 28), jnp.float32)
    out = mnist_forward(x, prepped)
    jax.block_until_ready(out)
    assert out.shape == (2, 10) and out.dtype == jnp.float32
    ref = mnist_reference(x, params)
    err = float(jnp.max(jnp.abs(out - ref)))
    assert jnp.allclose(out, ref, rtol=0.1, atol=2e-2), f"max abs err {err}"

    # Multi-tile grid path (B=32 -> Bt=16, grid=2): exercises index maps /
    # both TensorCores on v7x.
    x32 = jax.random.normal(jax.random.PRNGKey(1), (32, 1, 28, 28), jnp.float32)
    out32 = mnist_forward(x32, prepped)
    jax.block_until_ready(out32)
    ref32 = mnist_reference(x32, params)
    err32 = float(jnp.max(jnp.abs(out32 - ref32)))
    assert out32.shape == (32, 10)
    assert jnp.allclose(out32, ref32, rtol=0.1, atol=2e-2), f"max abs err {err32}"

    print("KERNEL_OK")
</pallas_src>

<mosaic_0001>
module attributes {stable_mosaic.version = 11 : i64} {
  func.func @_mnist_fused_kernel(%arg0: i32, %arg1: memref<128x640xbf16, #tpu.memory_space<vmem>>, %arg2: memref<640x128xbf16, #tpu.memory_space<vmem>>, %arg3: memref<1x128xf32, #tpu.memory_space<vmem>>, %arg4: memref<128x128xbf16, #tpu.memory_space<vmem>>, %arg5: memref<1x128xf32, #tpu.memory_space<vmem>>, %arg6: memref<2048x128xf32, #tpu.memory_space<vmem>>, %arg7: memref<1x128xf32, #tpu.memory_space<vmem>>, %arg8: memref<8x128xf32, #tpu.memory_space<vmem>>) attributes {dimension_semantics = [#tpu.dimension_semantics<parallel>], iteration_bounds = array<i64: 1>, scalar_prefetch = 0 : i64, scratch_operands = 0 : i64, tpu.core_type = #tpu.core_type<tc>, window_params = [{transform_indices = @transform_0, window_bounds = array<i64: 128, 640>}, {pipeline_mode = #tpu.pipeline_mode<synchronous>, transform_indices = @transform_1, window_bounds = array<i64: 640, 128>}, {pipeline_mode = #tpu.pipeline_mode<synchronous>, transform_indices = @transform_2, window_bounds = array<i64: 1, 128>}, {pipeline_mode = #tpu.pipeline_mode<synchronous>, transform_indices = @transform_3, window_bounds = array<i64: 128, 128>}, {pipeline_mode = #tpu.pipeline_mode<synchronous>, transform_indices = @transform_4, window_bounds = array<i64: 1, 128>}, {pipeline_mode = #tpu.pipeline_mode<synchronous>, transform_indices = @transform_5, window_bounds = array<i64: 2048, 128>}, {pipeline_mode = #tpu.pipeline_mode<synchronous>, transform_indices = @transform_6, window_bounds = array<i64: 1, 128>}, {transform_indices = @transform_7, window_bounds = array<i64: 8, 128>}]} {
    %c0 = arith.constant 0 : index
    %c0_0 = arith.constant 0 : index
    %0 = vector.load %arg1[%c0, %c0_0] : memref<128x640xbf16, #tpu.memory_space<vmem>>, vector<128x640xbf16>
    %c0_1 = arith.constant 0 : index
    %c0_2 = arith.constant 0 : index
    %1 = vector.load %arg2[%c0_1, %c0_2] : memref<640x128xbf16, #tpu.memory_space<vmem>>, vector<640x128xbf16>
    %cst = arith.constant dense<0.000000e+00> : vector<128x128xf32>
    %2 = tpu.matmul %0, %1, %cst {dimension_numbers = #tpu.dot_dimension_numbers<[1], [0], [0], [1], [0, 0, 1, 1], [], []>} : vector<128x640xbf16>, vector<640x128xbf16>, vector<128x128xf32> -> vector<128x128xf32>
    %c0_3 = arith.constant 0 : index
    %c0_4 = arith.constant 0 : index
    %3 = vector.load %arg3[%c0_3, %c0_4] : memref<1x128xf32, #tpu.memory_space<vmem>>, vector<1x128xf32>
    %4 = vector.broadcast %3 : vector<1x128xf32> to vector<128x128xf32>
    %5 = arith.addf %2, %4 : vector<128x128xf32>
    %6 = arith.mulf %5, %5 : vector<128x128xf32>
    %7 = arith.truncf %6 : vector<128x128xf32> to vector<128x128xbf16>
    %c0_5 = arith.constant 0 : index
    %c0_6 = arith.constant 0 : index
    %8 = vector.load %arg4[%c0_5, %c0_6] : memref<128x128xbf16, #tpu.memory_space<vmem>>, vector<128x128xbf16>
    %cst_7 = arith.constant dense<0.000000e+00> : vector<128x128xf32>
    %9 = tpu.matmul %7, %8, %cst_7 {dimension_numbers = #tpu.dot_dimension_numbers<[1], [0], [0], [1], [0, 0, 1, 1], [], []>} : vector<128x128xbf16>, vector<128x128xbf16>, vector<128x128xf32> -> vector<128x128xf32>
    %c0_8 = arith.constant 0 : index
    %c0_9 = arith.constant 0 : index
    %10 = vector.load %arg5[%c0_8, %c0_9] : memref<1x128xf32, #tpu.memory_space<vmem>>, vector<1x128xf32>
    %11 = vector.broadcast %10 : vector<1x128xf32> to vector<128x128xf32>
    %12 = arith.addf %9, %11 : vector<128x128xf32>
    %13 = arith.mulf %12, %12 : vector<128x128xf32>
    %14 = vector.extract_strided_slice %13 {offsets = [0, 0], sizes = [8, 128], strides = [1, 1]} : vector<128x128xf32> to vector<8x128xf32>
    %15 = vector.extract_strided_slice %13 {offsets = [8, 0], sizes = [8, 128], strides = [1, 1]} : vector<128x128xf32> to vector<8x128xf32>
    %16 = vector.extract_strided_slice %13 {offsets = [16, 0], sizes = [8, 128], strides = [1, 1]} : vector<128x128xf32> to vector<8x128xf32>
    %17 = vector.extract_strided_slice %13 {offsets = [24, 0], sizes = [8, 128], strides = [1, 1]} : vector<128x128xf32> to vector<8x128xf32>
    %18 = vector.extract_strided_slice %13 {offsets = [32, 0], sizes = [8, 128], strides = [1, 1]} : vector<128x128xf32> to vector<8x128xf32>
    %19 = vector.extract_strided_slice %13 {offsets = [40, 0], sizes = [8, 128], strides = [1, 1]} : vector<128x128xf32> to vector<8x128xf32>
    %20 = vector.extract_strided_slice %13 {offsets = [48, 0], sizes = [8, 128], strides = [1, 1]} : vector<128x128xf32> to vector<8x128xf32>
    %21 = vector.extract_strided_slice %13 {offsets = [56, 0], sizes = [8, 128], strides = [1, 1]} : vector<128x128xf32> to vector<8x128xf32>
    %22 = vector.extract_strided_slice %13 {offsets = [64, 0], sizes = [8, 128], strides = [1, 1]} : vector<128x128xf32> to vector<8x128xf32>
    %23 = vector.extract_strided_slice %13 {offsets = [72, 0], sizes = [8, 128], strides = [1, 1]} : vector<128x128xf32> to vector<8x128xf32>
    %24 = vector.extract_strided_slice %13 {offsets = [80, 0], sizes = [8, 128], strides = [1, 1]} : vector<128x128xf32> to vector<8x128xf32>
    %25 = vector.extract_strided_slice %13 {offsets = [88, 0], sizes = [8, 128], strides = [1, 1]} : vector<128x128xf32> to vector<8x128xf32>
    %26 = vector.extract_strided_slice %13 {offsets = [96, 0], sizes = [8, 128], strides = [1, 1]} : vector<128x128xf32> to vector<8x128xf32>
    %27 = vector.extract_strided_slice %13 {offsets = [104, 0], sizes = [8, 128], strides = [1, 1]} : vector<128x128xf32> to vector<8x128xf32>
    %28 = vector.extract_strided_slice %13 {offsets = [112, 0], sizes = [8, 128], strides = [1, 1]} : vector<128x128xf32> to vector<8x128xf32>
    %29 = vector.extract_strided_slice %13 {offsets = [120, 0], sizes = [8, 128], strides = [1, 1]} : vector<128x128xf32> to vector<8x128xf32>
    %30 = tpu.concatenate %14, %15, %16, %17, %18, %19, %20, %21, %22, %23, %24, %25, %26, %27, %28, %29 in 1 : vector<8x128xf32>, vector<8x128xf32>, vector<8x128xf32>, vector<8x128xf32>, vector<8x128xf32>, vector<8x128xf32>, vector<8x128xf32>, vector<8x128xf32>, vector<8x128xf32>, vector<8x128xf32>, vector<8x128xf32>, vector<8x128xf32>, vector<8x128xf32>, vector<8x128xf32>, vector<8x128xf32>, vector<8x128xf32> -> vector<8x2048xf32>
    %c0_10 = arith.constant 0 : index
    %c0_11 = arith.constant 0 : index
    %31 = vector.load %arg6[%c0_10, %c0_11] : memref<2048x128xf32, #tpu.memory_space<vmem>>, vector<2048x128xf32>
    %cst_12 = arith.constant dense<0.000000e+00> : vector<8x128xf32>
    %32 = tpu.matmul %30, %31, %cst_12 {dimension_numbers = #tpu.dot_dimension_numbers<[1], [0], [0], [1], [0, 0, 1, 1], [], []>} : vector<8x2048xf32>, vector<2048x128xf32>, vector<8x128xf32> -> vector<8x128xf32>
    %c0_13 = arith.constant 0 : index
    %c0_14 = arith.constant 0 : index
    %33 = vector.load %arg7[%c0_13, %c0_14] : memref<1x128xf32, #tpu.memory_space<vmem>>, vector<1x128xf32>
    %34 = vector.broadcast %33 : vector<1x128xf32> to vector<8x128xf32>
    %35 = arith.addf %32, %34 : vector<8x128xf32>
    %c0_15 = arith.constant 0 : index
    %c0_16 = arith.constant 0 : index
    %36 = vector.load %arg8[%c0_15, %c0_16] : memref<8x128xf32, #tpu.memory_space<vmem>>, vector<8x128xf32>
    tpu.vector_store %arg8[%c0_15, %c0_16], %35 {strides = array<i32>} : memref<8x128xf32, #tpu.memory_space<vmem>>, vector<8x128xf32>,
    return
  }
  func.func @transform_0(%arg0: i32) -> (i32, i32) {
    %c0_i32 = arith.constant 0 : i32
    %c0_i32_0 = arith.constant 0 : i32
    return %arg0, %c0_i32 : i32, i32
  }
  func.func @transform_1(%arg0: i32) -> (i32, i32) {
    %c0_i32 = arith.constant 0 : i32
    %c0_i32_0 = arith.constant 0 : i32
    %c0_i32_1 = arith.constant 0 : i32
    return %c0_i32, %c0_i32_0 : i32, i32
  }
  func.func @transform_2(%arg0: i32) -> (i32, i32) {
    %c0_i32 = arith.constant 0 : i32
    %c0_i32_0 = arith.constant 0 : i32
    %c0_i32_1 = arith.constant 0 : i32
    return %c0_i32, %c0_i32_0 : i32, i32
  }
  func.func @transform_3(%arg0: i32) -> (i32, i32) {
    %c0_i32 = arith.constant 0 : i32
    %c0_i32_0 = arith.constant 0 : i32
    %c0_i32_1 = arith.constant 0 : i32
    return %c0_i32, %c0_i32_0 : i32, i32
  }
  func.func @transform_4(%arg0: i32) -> (i32, i32) {
    %c0_i32 = arith.constant 0 : i32
    %c0_i32_0 = arith.constant 0 : i32
    %c0_i32_1 = arith.constant 0 : i32
    return %c0_i32, %c0_i32_0 : i32, i32
  }
  func.func @transform_5(%arg0: i32) -> (i32, i32) {
    %c0_i32 = arith.constant 0 : i32
    %c0_i32_0 = arith.constant 0 : i32
    %c0_i32_1 = arith.constant 0 : i32
    return %c0_i32, %c0_i32_0 : i32, i32
  }
  func.func @transform_6(%arg0: i32) -> (i32, i32) {
    %c0_i32 = arith.constant 0 : i32
    %c0_i32_0 = arith.constant 0 : i32
    %c0_i32_1 = arith.constant 0 : i32
    return %c0_i32, %c0_i32_0 : i32, i32
  }
  func.func @transform_7(%arg0: i32) -> (i32, i32) {
    %c0_i32 = arith.constant 0 : i32
    %c0_i32_0 = arith.constant 0 : i32
    return %arg0, %c0_i32 : i32, i32
  }
}

</mosaic_0001>

<llo_original>
// kernel: mnist_forward.1
$region0: #{mnist_forward.1}
  #allocation0 [shape = 'u32[]', space=smem, size = 0x4, offset = 0x4, fixed_abs, tag = 'smem constant byte address 0x4 - core index']
  #allocation1 [shape = 'u32[144,128]{1,0:T(1,128)}', space=vmem, size = 0x12000, scoped, tag = 'internal scratch']
  %s0 = inlined_call_operand.vmem [shape: bf16[128,640], index: 0, kind: input, shape index: {}]
  %s1 = inlined_call_operand.vmem [shape: bf16[640,128], index: 1, kind: input, shape index: {}]
  %s2 = inlined_call_operand.vmem [shape: f32[1,128], index: 2, kind: input, shape index: {}]
  %s3 = inlined_call_operand.vmem [shape: bf16[128,128], index: 3, kind: input, shape index: {}]
  %s4 = inlined_call_operand.vmem [shape: f32[1,128], index: 4, kind: input, shape index: {}]
  %s5 = inlined_call_operand.vmem [shape: f32[2048,128], index: 5, kind: input, shape index: {}]
  %s6 = inlined_call_operand.vmem [shape: f32[1,128], index: 6, kind: input, shape index: {}]
  %s7 = inlined_call_operand.vmem [shape: f32[8,128], index: 7, kind: output, shape index: {}]
  %s8 = sld [smem:[#allocation0]]
  $region38: #{mnist_forward.1} parent=0
    _
  %s10 = ssub.s32 1, %s8
  %s11 = scalar_select 0, %s10, %s8
  // Predicated region
  $region2: #{mnist_forward.1} parent=0 // pred_check
    _
  $region3: #{mnist_forward.1} parent=0 // pred_check_branch
    %13 = sbr.rel (0) target = $region5
  $region4: #{mnist_forward.1} parent=0 // pred_region
    _
  $region5: #{mnist_forward.1} parent=0 // pred_fallthru
    _
  // Predicated region
  $region6: #{mnist_forward.1} parent=0 // pred_check
    _
  $region7: #{mnist_forward.1} parent=0 // pred_check_branch
    %15 = sbr.rel (0) target = $region9
  $region8: #{mnist_forward.1} parent=0 // pred_region
    _
  $region9: #{mnist_forward.1} parent=0 // pred_fallthru
    _
  // Predicated region
  $region10: #{mnist_forward.1} parent=0 // pred_check
    _
  $region11: #{mnist_forward.1} parent=0 // pred_check_branch
    %17 = sbr.rel (0) target = $region13
  $region12: #{mnist_forward.1} parent=0 // pred_region
    _
  $region13: #{mnist_forward.1} parent=0 // pred_fallthru
    _
  // Predicated region
  $region14: #{mnist_forward.1} parent=0 // pred_check
    _
  $region15: #{mnist_forward.1} parent=0 // pred_check_branch
    %19 = sbr.rel (0) target = $region17
  $region16: #{mnist_forward.1} parent=0 // pred_region
    _
  $region17: #{mnist_forward.1} parent=0 // pred_fallthru
    _
  // Predicated region
  $region18: #{mnist_forward.1} parent=0 // pred_check
    _
  $region19: #{mnist_forward.1} parent=0 // pred_check_branch
    %21 = sbr.rel (0) target = $region21
  $region20: #{mnist_forward.1} parent=0 // pred_region
    _
  $region21: #{mnist_forward.1} parent=0 // pred_fallthru
    _
  // Predicated region
  $region22: #{mnist_forward.1} parent=0 // pred_check
    _
  $region23: #{mnist_forward.1} parent=0 // pred_check_branch
    %23 = sbr.rel (0) target = $region25
  $region24: #{mnist_forward.1} parent=0 // pred_region
    _
  $region25: #{mnist_forward.1} parent=0 // pred_fallthru
    _
  // Predicated region
  $region26: #{mnist_forward.1} parent=0 // pred_check
    _
  $region27: #{mnist_forward.1} parent=0 // pred_check_branch
    %25 = sbr.rel (0) target = $region29
  $region28: #{mnist_forward.1} parent=0 // pred_region
    _
  $region29: #{mnist_forward.1} parent=0 // pred_fallthru
    _
  %v27 = vld [vmem:[%s0] sm:$0xff]
  %v28 = vld [vmem:[%s0 + $0x8] sm:$0xff]
  %v29 = vld [vmem:[%s0 + $0x10] sm:$0xf]
  %v30 = vld [vmem:[%s0 + $0x14] sm:$0xff]
  %v31 = vld [vmem:[%s0 + $0x1c] sm:$0xff]
  %v32 = vld [vmem:[%s0 + $0x24] sm:$0xf]
  %v33 = vld [vmem:[%s0 + $0x28] sm:$0xff]
  %v34 = vld [vmem:[%s0 + $0x30] sm:$0xff]
  %v35 = vld [vmem:[%s0 + $0x38] sm:$0xf]
  %v36 = vld [vmem:[%s0 + $0x3c] sm:$0xff]
  %v37 = vld [vmem:[%s0 + $0x44] sm:$0xff]
  %v38 = vld [vmem:[%s0 + $0x4c] sm:$0xf]
  %v39 = vld [vmem:[%s0 + $0x50] sm:$0xff]
  %v40 = vld [vmem:[%s0 + $0x58] sm:$0xff]
  %v41 = vld [vmem:[%s0 + $0x60] sm:$0xf]
  %v42 = vld [vmem:[%s0 + $0x64] sm:$0xff]
  %v43 = vld [vmem:[%s0 + $0x6c] sm:$0xff]
  %v44 = vld [vmem:[%s0 + $0x74] sm:$0xf]
  %v45 = vld [vmem:[%s0 + $0x78] sm:$0xff]
  %v46 = vld [vmem:[%s0 + $0x80] sm:$0xff]
  %v47 = vld [vmem:[%s0 + $0x88] sm:$0xf]
  %v48 = vld [vmem:[%s0 + $0x8c] sm:$0xff]
  %v49 = vld [vmem:[%s0 + $0x94] sm:$0xff]
  %v50 = vld [vmem:[%s0 + $0x9c] sm:$0xf]
  %v51 = vld [vmem:[%s0 + $0xa0] sm:$0xff]
  %v52 = vld [vmem:[%s0 + $0xa8] sm:$0xff]
  %v53 = vld [vmem:[%s0 + $0xb0] sm:$0xf]
  %v54 = vld [vmem:[%s0 + $0xb4] sm:$0xff]
  %v55 = vld [vmem:[%s0 + $0xbc] sm:$0xff]
  %v56 = vld [vmem:[%s0 + $0xc4] sm:$0xf]
  %v57 = vld [vmem:[%s0 + $0xc8] sm:$0xff]
  %v58 = vld [vmem:[%s0 + $0xd0] sm:$0xff]
  %v59 = vld [vmem:[%s0 + $0xd8] sm:$0xf]
  %v60 = vld [vmem:[%s0 + $0xdc] sm:$0xff]
  %v61 = vld [vmem:[%s0 + $0xe4] sm:$0xff]
  %v62 = vld [vmem:[%s0 + $0xec] sm:$0xf]
  %v63 = vld [vmem:[%s0 + $0xf0] sm:$0xff]
  %v64 = vld [vmem:[%s0 + $0xf8] sm:$0xff]
  %v65 = vld [vmem:[%s0 + $0x100] sm:$0xf]
  %v66 = vld [vmem:[%s0 + $0x104] sm:$0xff]
  %v67 = vld [vmem:[%s0 + $0x10c] sm:$0xff]
  %v68 = vld [vmem:[%s0 + $0x114] sm:$0xf]
  %v69 = vld [vmem:[%s0 + $0x118] sm:$0xff]
  %v70 = vld [vmem:[%s0 + $0x120] sm:$0xff]
  %v71 = vld [vmem:[%s0 + $0x128] sm:$0xf]
  %v72 = vld [vmem:[%s0 + $0x12c] sm:$0xff]
  %v73 = vld [vmem:[%s0 + $0x134] sm:$0xff]
  %v74 = vld [vmem:[%s0 + $0x13c] sm:$0xf]
  %v75 = vld [vmem:[%s1] sm:$0xf]
  %v76 = vld [vmem:[%s1 + $0x4] sm:$0xf]
  %v77 = vld [vmem:[%s1 + $0x8] sm:$0xf]
  %v78 = vld [vmem:[%s1 + $0xc] sm:$0xf]
  %v79 = vld [vmem:[%s1 + $0x10] sm:$0xf]
  %v80 = vld [vmem:[%s1 + $0x14] sm:$0xf]
  %v81 = vld [vmem:[%s1 + $0x18] sm:$0xf]
  %v82 = vld [vmem:[%s1 + $0x1c] sm:$0xf]
  %v83 = vld [vmem:[%s1 + $0x20] sm:$0xf]
  %v84 = vld [vmem:[%s1 + $0x24] sm:$0xf]
  %v85 = vld [vmem:[%s1 + $0x28] sm:$0xf]
  %v86 = vld [vmem:[%s1 + $0x2c] sm:$0xf]
  %v87 = vld [vmem:[%s1 + $0x30] sm:$0xf]
  %v88 = vld [vmem:[%s1 + $0x34] sm:$0xf]
  %v89 = vld [vmem:[%s1 + $0x38] sm:$0xf]
  %v90 = vld [vmem:[%s1 + $0x3c] sm:$0xf]
  %v91 = vld [vmem:[%s1 + $0x40] sm:$0xf]
  %v92 = vld [vmem:[%s1 + $0x44] sm:$0xf]
  %v93 = vld [vmem:[%s1 + $0x48] sm:$0xf]
  %v94 = vld [vmem:[%s1 + $0x4c] sm:$0xf]
  %v95 = vld [vmem:[%s1 + $0x50] sm:$0xf]
  %v96 = vld [vmem:[%s1 + $0x54] sm:$0xf]
  %v97 = vld [vmem:[%s1 + $0x58] sm:$0xf]
  %v98 = vld [vmem:[%s1 + $0x5c] sm:$0xf]
  %v99 = vld [vmem:[%s1 + $0x60] sm:$0xf]
  %v100 = vld [vmem:[%s1 + $0x64] sm:$0xf]
  %v101 = vld [vmem:[%s1 + $0x68] sm:$0xf]
  %v102 = vld [vmem:[%s1 + $0x6c] sm:$0xf]
  %v103 = vld [vmem:[%s1 + $0x70] sm:$0xf]
  %v104 = vld [vmem:[%s1 + $0x74] sm:$0xf]
  %v105 = vld [vmem:[%s1 + $0x78] sm:$0xf]
  %v106 = vld [vmem:[%s1 + $0x7c] sm:$0xf]
  %v107 = vld [vmem:[%s1 + $0x80] sm:$0xf]
  %v108 = vld [vmem:[%s1 + $0x84] sm:$0xf]
  %v109 = vld [vmem:[%s1 + $0x88] sm:$0xf]
  %v110 = vld [vmem:[%s1 + $0x8c] sm:$0xf]
  %v111 = vld [vmem:[%s1 + $0x90] sm:$0xf]
  %v112 = vld [vmem:[%s1 + $0x94] sm:$0xf]
  %v113 = vld [vmem:[%s1 + $0x98] sm:$0xf]
  %v114 = vld [vmem:[%s1 + $0x9c] sm:$0xf]
  %v115 = vld [vmem:[%s1 + $0xa0] sm:$0xf]
  %v116 = vld [vmem:[%s1 + $0xa4] sm:$0xf]
  %v117 = vld [vmem:[%s1 + $0xa8] sm:$0xf]
  %v118 = vld [vmem:[%s1 + $0xac] sm:$0xf]
  %v119 = vld [vmem:[%s1 + $0xb0] sm:$0xf]
  %v120 = vld [vmem:[%s1 + $0xb4] sm:$0xf]
  %v121 = vld [vmem:[%s1 + $0xb8] sm:$0xf]
  %v122 = vld [vmem:[%s1 + $0xbc] sm:$0xf]
  %v123 = vld [vmem:[%s1 + $0xc0] sm:$0xf]
  %v124 = vld [vmem:[%s1 + $0xc4] sm:$0xf]
  %v125 = vld [vmem:[%s1 + $0xc8] sm:$0xf]
  %v126 = vld [vmem:[%s1 + $0xcc] sm:$0xf]
  %v127 = vld [vmem:[%s1 + $0xd0] sm:$0xf]
  %v128 = vld [vmem:[%s1 + $0xd4] sm:$0xf]
  %v129 = vld [vmem:[%s1 + $0xd8] sm:$0xf]
  %v130 = vld [vmem:[%s1 + $0xdc] sm:$0xf]
  %v131 = vld [vmem:[%s1 + $0xe0] sm:$0xf]
  %v132 = vld [vmem:[%s1 + $0xe4] sm:$0xf]
  %v133 = vld [vmem:[%s1 + $0xe8] sm:$0xf]
  %v134 = vld [vmem:[%s1 + $0xec] sm:$0xf]
  %v135 = vld [vmem:[%s1 + $0xf0] sm:$0xf]
  %v136 = vld [vmem:[%s1 + $0xf4] sm:$0xf]
  %v137 = vld [vmem:[%s1 + $0xf8] sm:$0xf]
  %v138 = vld [vmem:[%s1 + $0xfc] sm:$0xf]
  %v139 = vld [vmem:[%s1 + $0x100] sm:$0xf]
  %v140 = vld [vmem:[%s1 + $0x104] sm:$0xf]
  %v141 = vld [vmem:[%s1 + $0x108] sm:$0xf]
  %v142 = vld [vmem:[%s1 + $0x10c] sm:$0xf]
  %v143 = vld [vmem:[%s1 + $0x110] sm:$0xf]
  %v144 = vld [vmem:[%s1 + $0x114] sm:$0xf]
  %v145 = vld [vmem:[%s1 + $0x118] sm:$0xf]
  %v146 = vld [vmem:[%s1 + $0x11c] sm:$0xf]
  %v147 = vld [vmem:[%s1 + $0x120] sm:$0xf]
  %v148 = vld [vmem:[%s1 + $0x124] sm:$0xf]
  %v149 = vld [vmem:[%s1 + $0x128] sm:$0xf]
  %v150 = vld [vmem:[%s1 + $0x12c] sm:$0xf]
  %v151 = vld [vmem:[%s1 + $0x130] sm:$0xf]
  %v152 = vld [vmem:[%s1 + $0x134] sm:$0xf]
  %v153 = vld [vmem:[%s1 + $0x138] sm:$0xf]
  %v154 = vld [vmem:[%s1 + $0x13c] sm:$0xf]
  %v155 = vld [vmem:[%s2] sm:$0x1]
  %v157 = vlaneseq
  %v158 = vshrl.u32 %v157, 7
  %v159 = vsub.s32 0, %v158
  %v160 = vrot.slane %v155, %v159
  %v210 = vunpack.c.l.b16 %v27
  %v211 = vunpack.c.h.b16 %v27
  %v212 = vunpack.c.l.b16 %v28
  %v213 = vunpack.c.h.b16 %v28
  %v214 = vunpack.c.l.b16 %v29
  %v215 = vunpack.c.l.b16 %v30
  %v216 = vunpack.c.h.b16 %v30
  %v217 = vunpack.c.l.b16 %v31
  %v218 = vunpack.c.h.b16 %v31
  %v219 = vunpack.c.l.b16 %v32
  %v220 = vunpack.c.l.b16 %v33
  %v221 = vunpack.c.h.b16 %v33
  %v222 = vunpack.c.l.b16 %v34
  %v223 = vunpack.c.h.b16 %v34
  %v224 = vunpack.c.l.b16 %v35
  %v225 = vunpack.c.l.b16 %v36
  %v226 = vunpack.c.h.b16 %v36
  %v227 = vunpack.c.l.b16 %v37
  %v228 = vunpack.c.h.b16 %v37
  %v229 = vunpack.c.l.b16 %v38
  %v230 = vunpack.c.l.b16 %v39
  %v231 = vunpack.c.h.b16 %v39
  %v232 = vunpack.c.l.b16 %v40
  %v233 = vunpack.c.h.b16 %v40
  %v234 = vunpack.c.l.b16 %v41
  %v235 = vunpack.c.l.b16 %v42
  %v236 = vunpack.c.h.b16 %v42
  %v237 = vunpack.c.l.b16 %v43
  %v238 = vunpack.c.h.b16 %v43
  %v239 = vunpack.c.l.b16 %v44
  %v240 = vunpack.c.l.b16 %v45
  %v241 = vunpack.c.h.b16 %v45
  %v242 = vunpack.c.l.b16 %v46
  %v243 = vunpack.c.h.b16 %v46
  %v244 = vunpack.c.l.b16 %v47
  %v245 = vunpack.c.l.b16 %v48
  %v246 = vunpack.c.h.b16 %v48
  %v247 = vunpack.c.l.b16 %v49
  %v248 = vunpack.c.h.b16 %v49
  %v249 = vunpack.c.l.b16 %v50
  %v250 = vunpack.c.l.b16 %v51
  %v251 = vunpack.c.h.b16 %v51
  %v252 = vunpack.c.l.b16 %v52
  %v253 = vunpack.c.h.b16 %v52
  %v254 = vunpack.c.l.b16 %v53
  %v255 = vunpack.c.l.b16 %v54
  %v256 = vunpack.c.h.b16 %v54
  %v257 = vunpack.c.l.b16 %v55
  %v258 = vunpack.c.h.b16 %v55
  %v259 = vunpack.c.l.b16 %v56
  %v260 = vunpack.c.l.b16 %v57
  %v261 = vunpack.c.h.b16 %v57
  %v262 = vunpack.c.l.b16 %v58
  %v263 = vunpack.c.h.b16 %v58
  %v264 = vunpack.c.l.b16 %v59
  %v265 = vunpack.c.l.b16 %v60
  %v266 = vunpack.c.h.b16 %v60
  %v267 = vunpack.c.l.b16 %v61
  %v268 = vunpack.c.h.b16 %v61
  %v269 = vunpack.c.l.b16 %v62
  %v270 = vunpack.c.l.b16 %v63
  %v271 = vunpack.c.h.b16 %v63
  %v272 = vunpack.c.l.b16 %v64
  %v273 = vunpack.c.h.b16 %v64
  %v274 = vunpack.c.l.b16 %v65
  %v275 = vunpack.c.l.b16 %v66
  %v276 = vunpack.c.h.b16 %v66
  %v277 = vunpack.c.l.b16 %v67
  %v278 = vunpack.c.h.b16 %v67
  %v279 = vunpack.c.l.b16 %v68
  %v280 = vunpack.c.l.b16 %v69
  %v281 = vunpack.c.h.b16 %v69
  %v282 = vunpack.c.l.b16 %v70
  %v283 = vunpack.c.h.b16 %v70
  %v284 = vunpack.c.l.b16 %v71
  %v285 = vunpack.c.l.b16 %v72
  %v286 = vunpack.c.h.b16 %v72
  %v287 = vunpack.c.l.b16 %v73
  %v288 = vunpack.c.h.b16 %v73
  %v289 = vunpack.c.l.b16 %v74
  %v290 = vpack.c.b16 %v215, %v210
  %v291 = vpack.c.b16 %v216, %v211
  %v292 = vpack.c.b16 %v217, %v212
  %v293 = vpack.c.b16 %v218, %v213
  %v294 = vpack.c.b16 %v219, %v214
  %v295 = vpack.c.b16 %v225, %v220
  %v296 = vpack.c.b16 %v226, %v221
  %v297 = vpack.c.b16 %v227, %v222
  %v298 = vpack.c.b16 %v228, %v223
  %v299 = vpack.c.b16 %v229, %v224
  %v300 = vpack.c.b16 %v235, %v230
  %v301 = vpack.c.b16 %v236, %v231
  %v302 = vpack.c.b16 %v237, %v232
  %v303 = vpack.c.b16 %v238, %v233
  %v304 = vpack.c.b16 %v239, %v234
  %v305 = vpack.c.b16 %v245, %v240
  %v306 = vpack.c.b16 %v246, %v241
  %v307 = vpack.c.b16 %v247, %v242
  %v308 = vpack.c.b16 %v248, %v243
  %v309 = vpack.c.b16 %v249, %v244
  %v310 = vpack.c.b16 %v255, %v250
  %v311 = vpack.c.b16 %v256, %v251
  %v312 = vpack.c.b16 %v257, %v252
  %v313 = vpack.c.b16 %v258, %v253
  %v314 = vpack.c.b16 %v259, %v254
  %v315 = vpack.c.b16 %v265, %v260
  %v316 = vpack.c.b16 %v266, %v261
  %v317 = vpack.c.b16 %v267, %v262
  %v318 = vpack.c.b16 %v268, %v263
  %v319 = vpack.c.b16 %v269, %v264
  %v320 = vpack.c.b16 %v275, %v270
  %v321 = vpack.c.b16 %v276, %v271
  %v322 = vpack.c.b16 %v277, %v272
  %v323 = vpack.c.b16 %v278, %v273
  %v324 = vpack.c.b16 %v279, %v274
  %v325 = vpack.c.b16 %v285, %v280
  %v326 = vpack.c.b16 %v286, %v281
  %v327 = vpack.c.b16 %v287, %v282
  %v328 = vpack.c.b16 %v288, %v283
  %v329 = vpack.c.b16 %v289, %v284
  %v450 = vunpack.c.l.b16 %v75
  %v451 = vunpack.c.l.b16 %v76
  %v452 = vunpack.c.l.b16 %v77
  %v453 = vunpack.c.l.b16 %v78
  %v454 = vunpack.c.l.b16 %v79
  %v455 = vunpack.c.l.b16 %v80
  %v456 = vunpack.c.l.b16 %v81
  %v457 = vunpack.c.l.b16 %v82
  %v458 = vunpack.c.l.b16 %v83
  %v459 = vunpack.c.l.b16 %v84
  %v460 = vunpack.c.l.b16 %v85
  %v461 = vunpack.c.l.b16 %v86
  %v462 = vunpack.c.l.b16 %v87
  %v463 = vunpack.c.l.b16 %v88
  %v464 = vunpack.c.l.b16 %v89
  %v465 = vunpack.c.l.b16 %v90
  %v466 = vunpack.c.l.b16 %v91
  %v467 = vunpack.c.l.b16 %v92
  %v468 = vunpack.c.l.b16 %v93
  %v469 = vunpack.c.l.b16 %v94
  %v470 = vunpack.c.l.b16 %v95
  %v471 = vunpack.c.l.b16 %v96
  %v472 = vunpack.c.l.b16 %v97
  %v473 = vunpack.c.l.b16 %v98
  %v474 = vunpack.c.l.b16 %v99
  %v475 = vunpack.c.l.b16 %v100
  %v476 = vunpack.c.l.b16 %v101
  %v477 = vunpack.c.l.b16 %v102
  %v478 = vunpack.c.l.b16 %v103
  %v479 = vunpack.c.l.b16 %v104
  %v480 = vunpack.c.l.b16 %v105
  %v481 = vunpack.c.l.b16 %v106
  %v482 = vunpack.c.l.b16 %v107
  %v483 = vunpack.c.l.b16 %v108
  %v484 = vunpack.c.l.b16 %v109
  %v485 = vunpack.c.l.b16 %v110
  %v486 = vunpack.c.l.b16 %v111
  %v487 = vunpack.c.l.b16 %v112
  %v488 = vunpack.c.l.b16 %v113
  %v489 = vunpack.c.l.b16 %v114
  %v490 = vunpack.c.l.b16 %v115
  %v491 = vunpack.c.l.b16 %v116
  %v492 = vunpack.c.l.b16 %v117
  %v493 = vunpack.c.l.b16 %v118
  %v494 = vunpack.c.l.b16 %v119
  %v495 = vunpack.c.l.b16 %v120
  %v496 = vunpack.c.l.b16 %v121
  %v497 = vunpack.c.l.b16 %v122
  %v498 = vunpack.c.l.b16 %v123
  %v499 = vunpack.c.l.b16 %v124
  %v500 = vunpack.c.l.b16 %v125
  %v501 = vunpack.c.l.b16 %v126
  %v502 = vunpack.c.l.b16 %v127
  %v503 = vunpack.c.l.b16 %v128
  %v504 = vunpack.c.l.b16 %v129
  %v505 = vunpack.c.l.b16 %v130
  %v506 = vunpack.c.l.b16 %v131
  %v507 = vunpack.c.l.b16 %v132
  %v508 = vunpack.c.l.b16 %v133
  %v509 = vunpack.c.l.b16 %v134
  %v510 = vunpack.c.l.b16 %v135
  %v511 = vunpack.c.l.b16 %v136
  %v512 = vunpack.c.l.b16 %v137
  %v513 = vunpack.c.l.b16 %v138
  %v514 = vunpack.c.l.b16 %v139
  %v515 = vunpack.c.l.b16 %v140
  %v516 = vunpack.c.l.b16 %v141
  %v517 = vunpack.c.l.b16 %v142
  %v518 = vunpack.c.l.b16 %v143
  %v519 = vunpack.c.l.b16 %v144
  %v520 = vunpack.c.l.b16 %v145
  %v521 = vunpack.c.l.b16 %v146
  %v522 = vunpack.c.l.b16 %v147
  %v523 = vunpack.c.l.b16 %v148
  %v524 = vunpack.c.l.b16 %v149
  %v525 = vunpack.c.l.b16 %v150
  %v526 = vunpack.c.l.b16 %v151
  %v527 = vunpack.c.l.b16 %v152
  %v528 = vunpack.c.l.b16 %v153
  %v529 = vunpack.c.l.b16 %v154
  %v530 = vpack.c.b16 %v451, %v450
  %v531 = vpack.c.b16 %v453, %v452
  %v532 = vpack.c.b16 %v455, %v454
  %v533 = vpack.c.b16 %v457, %v456
  %v534 = vpack.c.b16 %v459, %v458
  %v535 = vpack.c.b16 %v461, %v460
  %v536 = vpack.c.b16 %v463, %v462
  %v537 = vpack.c.b16 %v465, %v464
  %v538 = vpack.c.b16 %v467, %v466
  %v539 = vpack.c.b16 %v469, %v468
  %v540 = vpack.c.b16 %v471, %v470
  %v541 = vpack.c.b16 %v473, %v472
  %v542 = vpack.c.b16 %v475, %v474
  %v543 = vpack.c.b16 %v477, %v476
  %v544 = vpack.c.b16 %v479, %v478
  %v545 = vpack.c.b16 %v481, %v480
  %v546 = vpack.c.b16 %v483, %v482
  %v547 = vpack.c.b16 %v485, %v484
  %v548 = vpack.c.b16 %v487, %v486
  %v549 = vpack.c.b16 %v489, %v488
  %v550 = vpack.c.b16 %v491, %v490
  %v551 = vpack.c.b16 %v493, %v492
  %v552 = vpack.c.b16 %v495, %v494
  %v553 = vpack.c.b16 %v497, %v496
  %v554 = vpack.c.b16 %v499, %v498
  %v555 = vpack.c.b16 %v501, %v500
  %v556 = vpack.c.b16 %v503, %v502
  %v557 = vpack.c.b16 %v505, %v504
  %v558 = vpack.c.b16 %v507, %v506
  %v559 = vpack.c.b16 %v509, %v508
  %v560 = vpack.c.b16 %v511, %v510
  %v561 = vpack.c.b16 %v513, %v512
  %v562 = vpack.c.b16 %v515, %v514
  %v563 = vpack.c.b16 %v517, %v516
  %v564 = vpack.c.b16 %v519, %v518
  %v565 = vpack.c.b16 %v521, %v520
  %v566 = vpack.c.b16 %v523, %v522
  %v567 = vpack.c.b16 %v525, %v524
  %v568 = vpack.c.b16 %v527, %v526
  %v569 = vpack.c.b16 %v529, %v528
  %610 = vmatprep.subr.bf16.mxu0 0
  %611 = vmatpush1.bf16.msra.mxu0 %v537
  %612 = vmatprep.subr.bf16.mxu0 0
  %613 = vmatpush1.bf16.msra.mxu0 %v536
  %614 = vmatprep.subr.bf16.mxu0 0
  %615 = vmatpush1.bf16.msra.mxu0 %v535
  %616 = vmatprep.subr.bf16.mxu0 0
  %617 = vmatpush1.bf16.msra.mxu0 %v534
  %618 = vmatprep.subr.bf16.mxu0 0
  %619 = vmatpush1.bf16.msra.mxu0 %v533
  %620 = vmatprep.subr.bf16.mxu0 0
  %621 = vmatpush1.bf16.msra.mxu0 %v532
  %622 = vmatprep.subr.bf16.mxu0 0
  %623 = vmatpush1.bf16.msra.mxu0 %v531
  %624 = vmatprep.subr.bf16.mxu0 0
  %625 = vmatpush1.bf16.msra.mxu0 %v530
  %626 = vmatprep.subr.bf16.mxu0 0
  %627 = vmatpush2.bf16.msra.mxu0 %v545
  %628 = vmatprep.subr.bf16.mxu0 0
  %629 = vmatpush2.bf16.msra.mxu0 %v544
  %630 = vmatprep.subr.bf16.mxu0 0
  %631 = vmatpush2.bf16.msra.mxu0 %v543
  %632 = vmatprep.subr.bf16.mxu0 0
  %633 = vmatpush2.bf16.msra.mxu0 %v542
  %634 = vmatprep.subr.bf16.mxu0 0
  %635 = vmatpush2.bf16.msra.mxu0 %v541
  %636 = vmatprep.subr.bf16.mxu0 0
  %637 = vmatpush2.bf16.msra.mxu0 %v540
  %638 = vmatprep.subr.bf16.mxu0 0
  %639 = vmatpush2.bf16.msra.mxu0 %v539
  %640 = vmatprep.subr.bf16.mxu0 0
  %641 = vmatpush2.bf16.msra.mxu0 %v538
  %642 = vmatprep.mubr.bf16.mxu0 %v291
  %643 = vmatmul.mubr.bf16.gmra.mxu0 %v290
  %v644 = vpop.f32.mrf.mxu0
  %v645 = vadd.f32 %v160, %v644
  %v646 = vpop.f32.mrf.mxu0
  %v647 = vpop.f32.mrf.mxu0
  %v648 = vadd.f32 %v160, %v647
  %v649 = vpop.f32.mrf.mxu0
  %650 = vmatprep.mubr.bf16.mxu0 %v296
  %651 = vmatmul.mubr.bf16.gmra.mxu0 %v295
  %v652 = vpop.f32.mrf.mxu0
  %v653 = vadd.f32 %v160, %v652
  %v654 = vpop.f32.mrf.mxu0
  %v655 = vpop.f32.mrf.mxu0
  %v656 = vadd.f32 %v160, %v655
  %v657 = vpop.f32.mrf.mxu0
  %658 = vmatprep.mubr.bf16.mxu0 %v301
  %659 = vmatmul.mubr.bf16.gmra.mxu0 %v300
  %v660 = vpop.f32.mrf.mxu0
  %v661 = vadd.f32 %v160, %v660
  %v662 = vpop.f32.mrf.mxu0
  %v663 = vpop.f32.mrf.mxu0
  %v664 = vadd.f32 %v160, %v663
  %v665 = vpop.f32.mrf.mxu0
  %666 = vmatprep.mubr.bf16.mxu0 %v306
  %667 = vmatmul.mubr.bf16.gmra.mxu0 %v305
  %v668 = vpop.f32.mrf.mxu0
  %v669 = vadd.f32 %v160, %v668
  %v670 = vpop.f32.mrf.mxu0
  %v671 = vpop.f32.mrf.mxu0
  %v672 = vadd.f32 %v160, %v671
  %v673 = vpop.f32.mrf.mxu0
  %674 = vmatprep.mubr.bf16.mxu0 %v311
  %675 = vmatmul.mubr.bf16.gmra.mxu0 %v310
  %v676 = vpop.f32.mrf.mxu0
  %v677 = vadd.f32 %v160, %v676
  %v678 = vpop.f32.mrf.mxu0
  %v679 = vpop.f32.mrf.mxu0
  %v680 = vadd.f32 %v160, %v679
  %v681 = vpop.f32.mrf.mxu0
  %682 = vmatprep.mubr.bf16.mxu0 %v316
  %683 = vmatmul.mubr.bf16.gmra.mxu0 %v315
  %v684 = vpop.f32.mrf.mxu0
  %v685 = vadd.f32 %v160, %v684
  %v686 = vpop.f32.mrf.mxu0
  %v687 = vpop.f32.mrf.mxu0
  %v688 = vadd.f32 %v160, %v687
  %v689 = vpop.f32.mrf.mxu0
  %690 = vmatprep.mubr.bf16.mxu0 %v321
  %691 = vmatmul.mubr.bf16.gmra.mxu0 %v320
  %v692 = vpop.f32.mrf.mxu0
  %v693 = vadd.f32 %v160, %v692
  %v694 = vpop.f32.mrf.mxu0
  %v695 = vpop.f32.mrf.mxu0
  %v696 = vadd.f32 %v160, %v695
  %v697 = vpop.f32.mrf.mxu0
  %698 = vmatprep.mubr.bf16.mxu0 %v326
  %699 = vmatmul.mubr.bf16.gmra.mxu0 %v325
  %v700 = vpop.f32.mrf.mxu0
  %v701 = vadd.f32 %v160, %v700
  %v702 = vpop.f32.mrf.mxu0
  %v703 = vpop.f32.mrf.mxu0
  %v704 = vadd.f32 %v160, %v703
  %v705 = vpop.f32.mrf.mxu0
  %706 = vdwg.mxu0
  %707 = vmatprep.subr.bf16.mxu0 0
  %708 = vmatpush1.bf16.msra.mxu0 %v553
  %709 = vmatprep.subr.bf16.mxu0 0
  %710 = vmatpush1.bf16.msra.mxu0 %v552
  %711 = vmatprep.subr.bf16.mxu0 0
  %712 = vmatpush1.bf16.msra.mxu0 %v551
  %713 = vmatprep.subr.bf16.mxu0 0
  %714 = vmatpush1.bf16.msra.mxu0 %v550
  %715 = vmatprep.subr.bf16.mxu0 0
  %716 = vmatpush1.bf16.msra.mxu0 %v549
  %717 = vmatprep.subr.bf16.mxu0 0
  %718 = vmatpush1.bf16.msra.mxu0 %v548
  %719 = vmatprep.subr.bf16.mxu0 0
  %720 = vmatpush1.bf16.msra.mxu0 %v547
  %721 = vmatprep.subr.bf16.mxu0 0
  %722 = vmatpush1.bf16.msra.mxu0 %v546
  %723 = vmatprep.subr.bf16.mxu0 0
  %724 = vmatpush2.bf16.msra.mxu0 %v561
  %725 = vmatprep.subr.bf16.mxu0 0
  %726 = vmatpush2.bf16.msra.mxu0 %v560
  %727 = vmatprep.subr.bf16.mxu0 0
  %728 = vmatpush2.bf16.msra.mxu0 %v559
  %729 = vmatprep.subr.bf16.mxu0 0
  %730 = vmatpush2.bf16.msra.mxu0 %v558
  %731 = vmatprep.subr.bf16.mxu0 0
  %732 = vmatpush2.bf16.msra.mxu0 %v557
  %733 = vmatprep.subr.bf16.mxu0 0
  %734 = vmatpush2.bf16.msra.mxu0 %v556
  %735 = vmatprep.subr.bf16.mxu0 0
  %736 = vmatpush2.bf16.msra.mxu0 %v555
  %737 = vmatprep.subr.bf16.mxu0 0
  %738 = vmatpush2.bf16.msra.mxu0 %v554
  %739 = vmatprep.mubr.bf16.mxu0 %v293
  %740 = vmatmul.mubr.bf16.gmra.mxu0 %v292
  %v741 = vpop.f32.mrf.mxu0
  %v742 = vadd.f32 %v645, %v741
  %v743 = vpop.f32.mrf.mxu0
  %v744 = vpop.f32.mrf.mxu0
  %v745 = vadd.f32 %v648, %v744
  %v746 = vpop.f32.mrf.mxu0
  %747 = vmatprep.mubr.bf16.mxu0 %v298
  %748 = vmatmul.mubr.bf16.gmra.mxu0 %v297
  %v749 = vpop.f32.mrf.mxu0
  %v750 = vadd.f32 %v653, %v749
  %v751 = vpop.f32.mrf.mxu0
  %v752 = vpop.f32.mrf.mxu0
  %v753 = vadd.f32 %v656, %v752
  %v754 = vpop.f32.mrf.mxu0
  %755 = vmatprep.mubr.bf16.mxu0 %v303
  %756 = vmatmul.mubr.bf16.gmra.mxu0 %v302
  %v757 = vpop.f32.mrf.mxu0
  %v758 = vadd.f32 %v661, %v757
  %v759 = vpop.f32.mrf.mxu0
  %v760 = vpop.f32.mrf.mxu0
  %v761 = vadd.f32 %v664, %v760
  %v762 = vpop.f32.mrf.mxu0
  %763 = vmatprep.mubr.bf16.mxu0 %v308
  %764 = vmatmul.mubr.bf16.gmra.mxu0 %v307
  %v765 = vpop.f32.mrf.mxu0
  %v766 = vadd.f32 %v669, %v765
  %v767 = vpop.f32.mrf.mxu0
  %v768 = vpop.f32.mrf.mxu0
  %v769 = vadd.f32 %v672, %v768
  %v770 = vpop.f32.mrf.mxu0
  %771 = vmatprep.mubr.bf16.mxu0 %v313
  %772 = vmatmul.mubr.bf16.gmra.mxu0 %v312
  %v773 = vpop.f32.mrf.mxu0
  %v774 = vadd.f32 %v677, %v773
  %v775 = vpop.f32.mrf.mxu0
  %v776 = vpop.f32.mrf.mxu0
  %v777 = vadd.f32 %v680, %v776
  %v778 = vpop.f32.mrf.mxu0
  %779 = vmatprep.mubr.bf16.mxu0 %v318
  %780 = vmatmul.mubr.bf16.gmra.mxu0 %v317
  %v781 = vpop.f32.mrf.mxu0
  %v782 = vadd.f32 %v685, %v781
  %v783 = vpop.f32.mrf.mxu0
  %v784 = vpop.f32.mrf.mxu0
  %v785 = vadd.f32 %v688, %v784
  %v786 = vpop.f32.mrf.mxu0
  %787 = vmatprep.mubr.bf16.mxu0 %v323
  %788 = vmatmul.mubr.bf16.gmra.mxu0 %v322
  %v789 = vpop.f32.mrf.mxu0
  %v790 = vadd.f32 %v693, %v789
  %v791 = vpop.f32.mrf.mxu0
  %v792 = vpop.f32.mrf.mxu0
  %v793 = vadd.f32 %v696, %v792
  %v794 = vpop.f32.mrf.mxu0
  %795 = vmatprep.mubr.bf16.mxu0 %v328
  %796 = vmatmul.mubr.bf16.gmra.mxu0 %v327
  %v797 = vpop.f32.mrf.mxu0
  %v798 = vadd.f32 %v701, %v797
  %v799 = vpop.f32.mrf.mxu0
  %v800 = vpop.f32.mrf.mxu0
  %v801 = vadd.f32 %v704, %v800
  %v802 = vpop.f32.mrf.mxu0
  %803 = vdwg.mxu0
  %804 = vmatprep.subr.bf16.mxu0 0
  %805 = vmatpush1.bf16.msra.mxu0 %v569
  %806 = vmatprep.subr.bf16.mxu0 0
  %807 = vmatpush1.bf16.msra.mxu0 %v568
  %808 = vmatprep.subr.bf16.mxu0 0
  %809 = vmatpush1.bf16.msra.mxu0 %v567
  %810 = vmatprep.subr.bf16.mxu0 0
  %811 = vmatpush1.bf16.msra.mxu0 %v566
  %812 = vmatprep.subr.bf16.mxu0 0
  %813 = vmatpush1.bf16.msra.mxu0 %v565
  %814 = vmatprep.subr.bf16.mxu0 0
  %815 = vmatpush1.bf16.msra.mxu0 %v564
  %816 = vmatprep.subr.bf16.mxu0 0
  %817 = vmatpush1.bf16.msra.mxu0 %v563
  %818 = vmatprep.subr.bf16.mxu0 0
  %819 = vmatpush1.bf16.msra.mxu0 %v562
  %820 = vmatprep.subr.bf16.mxu0 0
  %821 = vmatpush2.bf16.msra.mxu0 0
  %822 = vmatprep.subr.bf16.mxu0 0
  %823 = vmatpush2.bf16.msra.mxu0 0
  %824 = vmatprep.subr.bf16.mxu0 0
  %825 = vmatpush2.bf16.msra.mxu0 0
  %826 = vmatprep.subr.bf16.mxu0 0
  %827 = vmatpush2.bf16.msra.mxu0 0
  %828 = vmatprep.subr.bf16.mxu0 0
  %829 = vmatpush2.bf16.msra.mxu0 0
  %830 = vmatprep.subr.bf16.mxu0 0
  %831 = vmatpush2.bf16.msra.mxu0 0
  %832 = vmatprep.subr.bf16.mxu0 0
  %833 = vmatpush2.bf16.msra.mxu0 0
  %834 = vmatprep.subr.bf16.mxu0 0
  %835 = vmatpush2.bf16.msra.mxu0 0
  %836 = vmatprep.mubr.bf16.mxu0 0
  %837 = vmatmul.mubr.bf16.gmra.mxu0 %v294
  %v838 = vpop.f32.mrf.mxu0
  %v839 = vadd.f32 %v742, %v838
  %v840 = vpop.f32.mrf.mxu0
  %v841 = vpop.f32.mrf.mxu0
  %v842 = vadd.f32 %v745, %v841
  %v843 = vpop.f32.mrf.mxu0
  %844 = vmatprep.mubr.bf16.mxu0 0
  %845 = vmatmul.mubr.bf16.gmra.mxu0 %v299
  %v846 = vpop.f32.mrf.mxu0
  %v847 = vadd.f32 %v750, %v846
  %v848 = vpop.f32.mrf.mxu0
  %v849 = vpop.f32.mrf.mxu0
  %v850 = vadd.f32 %v753, %v849
  %v851 = vpop.f32.mrf.mxu0
  %852 = vmatprep.mubr.bf16.mxu0 0
  %853 = vmatmul.mubr.bf16.gmra.mxu0 %v304
  %v854 = vpop.f32.mrf.mxu0
  %v855 = vadd.f32 %v758, %v854
  %v856 = vpop.f32.mrf.mxu0
  %v857 = vpop.f32.mrf.mxu0
  %v858 = vadd.f32 %v761, %v857
  %v859 = vpop.f32.mrf.mxu0
  %860 = vmatprep.mubr.bf16.mxu0 0
  %861 = vmatmul.mubr.bf16.gmra.mxu0 %v309
  %v862 = vpop.f32.mrf.mxu0
  %v863 = vadd.f32 %v766, %v862
  %v864 = vpop.f32.mrf.mxu0
  %v865 = vpop.f32.mrf.mxu0
  %v866 = vadd.f32 %v769, %v865
  %v867 = vpop.f32.mrf.mxu0
  %868 = vmatprep.mubr.bf16.mxu0 0
  %869 = vmatmul.mubr.bf16.gmra.mxu0 %v314
  %v870 = vpop.f32.mrf.mxu0
  %v871 = vadd.f32 %v774, %v870
  %v872 = vpop.f32.mrf.mxu0
  %v873 = vpop.f32.mrf.mxu0
  %v874 = vadd.f32 %v777, %v873
  %v875 = vpop.f32.mrf.mxu0
  %876 = vmatprep.mubr.bf16.mxu0 0
  %877 = vmatmul.mubr.bf16.gmra.mxu0 %v319
  %v878 = vpop.f32.mrf.mxu0
  %v879 = vadd.f32 %v782, %v878
  %v880 = vpop.f32.mrf.mxu0
  %v881 = vpop.f32.mrf.mxu0
  %v882 = vadd.f32 %v785, %v881
  %v883 = vpop.f32.mrf.mxu0
  %884 = vmatprep.mubr.bf16.mxu0 0
  %885 = vmatmul.mubr.bf16.gmra.mxu0 %v324
  %v886 = vpop.f32.mrf.mxu0
  %v887 = vadd.f32 %v790, %v886
  %v888 = vpop.f32.mrf.mxu0
  %v889 = vpop.f32.mrf.mxu0
  %v890 = vadd.f32 %v793, %v889
  %v891 = vpop.f32.mrf.mxu0
  %892 = vmatprep.mubr.bf16.mxu0 0
  %893 = vmatmul.mubr.bf16.gmra.mxu0 %v329
  %v894 = vpop.f32.mrf.mxu0
  %v895 = vadd.f32 %v798, %v894
  %v896 = vpop.f32.mrf.mxu0
  %v897 = vpop.f32.mrf.mxu0
  %v898 = vadd.f32 %v801, %v897
  %v899 = vpop.f32.mrf.mxu0
  %900 = vdwg.mxu0
  %v901 = vmul.f32 %v839, %v839
  %v902 = vmul.f32 %v842, %v842
  %v903 = vmul.f32 %v847, %v847
  %v904 = vmul.f32 %v850, %v850
  %v905 = vmul.f32 %v855, %v855
  %v906 = vmul.f32 %v858, %v858
  %v907 = vmul.f32 %v863, %v863
  %v908 = vmul.f32 %v866, %v866
  %v909 = vmul.f32 %v871, %v871
  %v910 = vmul.f32 %v874, %v874
  %v911 = vmul.f32 %v879, %v879
  %v912 = vmul.f32 %v882, %v882
  %v913 = vmul.f32 %v887, %v887
  %v914 = vmul.f32 %v890, %v890
  %v915 = vmul.f32 %v895, %v895
  %v916 = vmul.f32 %v898, %v898
  %v917 = vpack.c.bf16 %v902, %v901
  %v918 = vpack.c.bf16 %v904, %v903
  %v919 = vpack.c.bf16 %v906, %v905
  %v920 = vpack.c.bf16 %v908, %v907
  %v921 = vpack.c.bf16 %v910, %v909
  %v922 = vpack.c.bf16 %v912, %v911
  %v923 = vpack.c.bf16 %v914, %v913
  %v924 = vpack.c.bf16 %v916, %v915
  %v925 = vld [vmem:[%s3] sm:$0xf]
  %v926 = vld [vmem:[%s3 + $0x4] sm:$0xf]
  %v927 = vld [vmem:[%s3 + $0x8] sm:$0xf]
  %v928 = vld [vmem:[%s3 + $0xc] sm:$0xf]
  %v929 = vld [vmem:[%s3 + $0x10] sm:$0xf]
  %v930 = vld [vmem:[%s3 + $0x14] sm:$0xf]
  %v931 = vld [vmem:[%s3 + $0x18] sm:$0xf]
  %v932 = vld [vmem:[%s3 + $0x1c] sm:$0xf]
  %v933 = vld [vmem:[%s3 + $0x20] sm:$0xf]
  %v934 = vld [vmem:[%s3 + $0x24] sm:$0xf]
  %v935 = vld [vmem:[%s3 + $0x28] sm:$0xf]
  %v936 = vld [vmem:[%s3 + $0x2c] sm:$0xf]
  %v937 = vld [vmem:[%s3 + $0x30] sm:$0xf]
  %v938 = vld [vmem:[%s3 + $0x34] sm:$0xf]
  %v939 = vld [vmem:[%s3 + $0x38] sm:$0xf]
  %v940 = vld [vmem:[%s3 + $0x3c] sm:$0xf]
  %v941 = vld [vmem:[%s4] sm:$0x1]
  %v943 = vlaneseq
  %v944 = vshrl.u32 %v943, 7
  %v945 = vsub.s32 0, %v944
  %v946 = vrot.slane %v941, %v945
  %v964 = vunpack.c.l.b16 %v925
  %v965 = vunpack.c.l.b16 %v926
  %v966 = vunpack.c.l.b16 %v927
  %v967 = vunpack.c.l.b16 %v928
  %v968 = vunpack.c.l.b16 %v929
  %v969 = vunpack.c.l.b16 %v930
  %v970 = vunpack.c.l.b16 %v931
  %v971 = vunpack.c.l.b16 %v932
  %v972 = vunpack.c.l.b16 %v933
  %v973 = vunpack.c.l.b16 %v934
  %v974 = vunpack.c.l.b16 %v935
  %v975 = vunpack.c.l.b16 %v936
  %v976 = vunpack.c.l.b16 %v937
  %v977 = vunpack.c.l.b16 %v938
  %v978 = vunpack.c.l.b16 %v939
  %v979 = vunpack.c.l.b16 %v940
  %v980 = vpack.c.b16 %v965, %v964
  %v981 = vpack.c.b16 %v967, %v966
  %v982 = vpack.c.b16 %v969, %v968
  %v983 = vpack.c.b16 %v971, %v970
  %v984 = vpack.c.b16 %v973, %v972
  %v985 = vpack.c.b16 %v975, %v974
  %v986 = vpack.c.b16 %v977, %v976
  %v987 = vpack.c.b16 %v979, %v978
  %996 = vmatprep.subr.bf16.mxu0 0
  %997 = vmatpush1.bf16.msra.mxu0 %v987
  %998 = vmatprep.subr.bf16.mxu0 0
  %999 = vmatpush1.bf16.msra.mxu0 %v986
  %1000 = vmatprep.subr.bf16.mxu0 0
  %1001 = vmatpush1.bf16.msra.mxu0 %v985
  %1002 = vmatprep.subr.bf16.mxu0 0
  %1003 = vmatpush1.bf16.msra.mxu0 %v984
  %1004 = vmatprep.subr.bf16.mxu0 0
  %1005 = vmatpush1.bf16.msra.mxu0 %v983
  %1006 = vmatprep.subr.bf16.mxu0 0
  %1007 = vmatpush1.bf16.msra.mxu0 %v982
  %1008 = vmatprep.subr.bf16.mxu0 0
  %1009 = vmatpush1.bf16.msra.mxu0 %v981
  %1010 = vmatprep.subr.bf16.mxu0 0
  %1011 = vmatpush1.bf16.msra.mxu0 %v980
  %1012 = vmatprep.subr.bf16.mxu0 0
  %1013 = vmatpush2.bf16.msra.mxu0 0
  %1014 = vmatprep.subr.bf16.mxu0 0
  %1015 = vmatpush2.bf16.msra.mxu0 0
  %1016 = vmatprep.subr.bf16.mxu0 0
  %1017 = vmatpush2.bf16.msra.mxu0 0
  %1018 = vmatprep.subr.bf16.mxu0 0
  %1019 = vmatpush2.bf16.msra.mxu0 0
  %1020 = vmatprep.subr.bf16.mxu0 0
  %1021 = vmatpush2.bf16.msra.mxu0 0
  %1022 = vmatprep.subr.bf16.mxu0 0
  %1023 = vmatpush2.bf16.msra.mxu0 0
  %1024 = vmatprep.subr.bf16.mxu0 0
  %1025 = vmatpush2.bf16.msra.mxu0 0
  %1026 = vmatprep.subr.bf16.mxu0 0
  %1027 = vmatpush2.bf16.msra.mxu0 0
  %1028 = vmatprep.mubr.bf16.mxu0 0
  %1029 = vmatmul.mubr.bf16.gmra.mxu0 %v917
  %v1030 = vpop.f32.mrf.mxu0
  %v1031 = vadd.f32 %v946, %v1030
  %v1032 = vpop.f32.mrf.mxu0
  %v1033 = vpop.f32.mrf.mxu0
  %v1034 = vadd.f32 %v946, %v1033
  %v1035 = vpop.f32.mrf.mxu0
  %1036 = vmatprep.mubr.bf16.mxu0 0
  %1037 = vmatmul.mubr.bf16.gmra.mxu0 %v918
  %v1038 = vpop.f32.mrf.mxu0
  %v1039 = vadd.f32 %v946, %v1038
  %v1040 = vpop.f32.mrf.mxu0
  %v1041 = vpop.f32.mrf.mxu0
  %v1042 = vadd.f32 %v946, %v1041
  %v1043 = vpop.f32.mrf.mxu0
  %1044 = vmatprep.mubr.bf16.mxu0 0
  %1045 = vmatmul.mubr.bf16.gmra.mxu0 %v919
  %v1046 = vpop.f32.mrf.mxu0
  %v1047 = vadd.f32 %v946, %v1046
  %v1048 = vpop.f32.mrf.mxu0
  %v1049 = vpop.f32.mrf.mxu0
  %v1050 = vadd.f32 %v946, %v1049
  %v1051 = vpop.f32.mrf.mxu0
  %1052 = vmatprep.mubr.bf16.mxu0 0
  %1053 = vmatmul.mubr.bf16.gmra.mxu0 %v920
  %v1054 = vpop.f32.mrf.mxu0
  %v1055 = vadd.f32 %v946, %v1054
  %v1056 = vpop.f32.mrf.mxu0
  %v1057 = vpop.f32.mrf.mxu0
  %v1058 = vadd.f32 %v946, %v1057
  %v1059 = vpop.f32.mrf.mxu0
  %1060 = vmatprep.mubr.bf16.mxu0 0
  %1061 = vmatmul.mubr.bf16.gmra.mxu0 %v921
  %v1062 = vpop.f32.mrf.mxu0
  %v1063 = vadd.f32 %v946, %v1062
  %v1064 = vpop.f32.mrf.mxu0
  %v1065 = vpop.f32.mrf.mxu0
  %v1066 = vadd.f32 %v946, %v1065
  %v1067 = vpop.f32.mrf.mxu0
  %1068 = vmatprep.mubr.bf16.mxu0 0
  %1069 = vmatmul.mubr.bf16.gmra.mxu0 %v922
  %v1070 = vpop.f32.mrf.mxu0
  %v1071 = vadd.f32 %v946, %v1070
  %v1072 = vpop.f32.mrf.mxu0
  %v1073 = vpop.f32.mrf.mxu0
  %v1074 = vadd.f32 %v946, %v1073
  %v1075 = vpop.f32.mrf.mxu0
  %1076 = vmatprep.mubr.bf16.mxu0 0
  %1077 = vmatmul.mubr.bf16.gmra.mxu0 %v923
  %v1078 = vpop.f32.mrf.mxu0
  %v1079 = vadd.f32 %v946, %v1078
  %v1080 = vpop.f32.mrf.mxu0
  %v1081 = vpop.f32.mrf.mxu0
  %v1082 = vadd.f32 %v946, %v1081
  %v1083 = vpop.f32.mrf.mxu0
  %1084 = vmatprep.mubr.bf16.mxu0 0
  %1085 = vmatmul.mubr.bf16.gmra.mxu0 %v924
  %v1086 = vpop.f32.mrf.mxu0
  %v1087 = vadd.f32 %v946, %v1086
  %v1088 = vpop.f32.mrf.mxu0
  %v1089 = vpop.f32.mrf.mxu0
  %v1090 = vadd.f32 %v946, %v1089
  %v1091 = vpop.f32.mrf.mxu0
  %1092 = vdwg.mxu0
  %v1093 = vmul.f32 %v1031, %v1031
  %v1094 = vmul.f32 %v1034, %v1034
  %v1095 = vmul.f32 %v1039, %v1039
  %v1096 = vmul.f32 %v1042, %v1042
  %v1097 = vmul.f32 %v1047, %v1047
  %v1098 = vmul.f32 %v1050, %v1050
  %v1099 = vmul.f32 %v1055, %v1055
  %v1100 = vmul.f32 %v1058, %v1058
  %v1101 = vmul.f32 %v1063, %v1063
  %v1102 = vmul.f32 %v1066, %v1066
  %v1103 = vmul.f32 %v1071, %v1071
  %v1104 = vmul.f32 %v1074, %v1074
  %v1105 = vmul.f32 %v1079, %v1079
  %v1106 = vmul.f32 %v1082, %v1082
  %v1107 = vmul.f32 %v1087, %v1087
  %v1108 = vmul.f32 %v1090, %v1090
  %v1109 = vld [vmem:[%s5] sm:$0xff]
  %v1110 = vld [vmem:[%s5 + $0x8] sm:$0xff]
  %v1111 = vld [vmem:[%s5 + $0x10] sm:$0xff]
  %v1112 = vld [vmem:[%s5 + $0x18] sm:$0xff]
  %v1113 = vld [vmem:[%s5 + $0x20] sm:$0xff]
  %v1114 = vld [vmem:[%s5 + $0x28] sm:$0xff]
  %v1115 = vld [vmem:[%s5 + $0x30] sm:$0xff]
  %v1116 = vld [vmem:[%s5 + $0x38] sm:$0xff]
  %v1117 = vld [vmem:[%s5 + $0x40] sm:$0xff]
  %v1118 = vld [vmem:[%s5 + $0x48] sm:$0xff]
  %v1119 = vld [vmem:[%s5 + $0x50] sm:$0xff]
  %v1120 = vld [vmem:[%s5 + $0x58] sm:$0xff]
  %v1121 = vld [vmem:[%s5 + $0x60] sm:$0xff]
  %v1122 = vld [vmem:[%s5 + $0x68] sm:$0xff]
  %v1123 = vld [vmem:[%s5 + $0x70] sm:$0xff]
  %v1124 = vld [vmem:[%s5 + $0x78] sm:$0xff]
  %v1125 = vld [vmem:[%s5 + $0x80] sm:$0xff]
  %v1126 = vld [vmem:[%s5 + $0x88] sm:$0xff]
  %v1127 = vld [vmem:[%s5 + $0x90] sm:$0xff]
  %v1128 = vld [vmem:[%s5 + $0x98] sm:$0xff]
  %v1129 = vld [vmem:[%s5 + $0xa0] sm:$0xff]
  %v1130 = vld [vmem:[%s5 + $0xa8] sm:$0xff]
  %v1131 = vld [vmem:[%s5 + $0xb0] sm:$0xff]
  %v1132 = vld [vmem:[%s5 + $0xb8] sm:$0xff]
  %v1133 = vld [vmem:[%s5 + $0xc0] sm:$0xff]
  %v1134 = vld [vmem:[%s5 + $0xc8] sm:$0xff]
  %v1135 = vld [vmem:[%s5 + $0xd0] sm:$0xff]
  %v1136 = vld [vmem:[%s5 + $0xd8] sm:$0xff]
  %v1137 = vld [vmem:[%s5 + $0xe0] sm:$0xff]
  %v1138 = vld [vmem:[%s5 + $0xe8] sm:$0xff]
  %v1139 = vld [vmem:[%s5 + $0xf0] sm:$0xff]
  %v1140 = vld [vmem:[%s5 + $0xf8] sm:$0xff]
  %v1141 = vld [vmem:[%s5 + $0x100] sm:$0xff]
  %v1142 = vld [vmem:[%s5 + $0x108] sm:$0xff]
  %v1143 = vld [vmem:[%s5 + $0x110] sm:$0xff]
  %v1144 = vld [vmem:[%s5 + $0x118] sm:$0xff]
  %v1145 = vld [vmem:[%s5 + $0x120] sm:$0xff]
  %v1146 = vld [vmem:[%s5 + $0x128] sm:$0xff]
  %v1147 = vld [vmem:[%s5 + $0x130] sm:$0xff]
  %v1148 = vld [vmem:[%s5 + $0x138] sm:$0xff]
  %v1149 = vld [vmem:[%s5 + $0x140] sm:$0xff]
  %v1150 = vld [vmem:[%s5 + $0x148] sm:$0xff]
  %v1151 = vld [vmem:[%s5 + $0x150] sm:$0xff]
  %v1152 = vld [vmem:[%s5 + $0x158] sm:$0xff]
  %v1153 = vld [vmem:[%s5 + $0x160] sm:$0xff]
  %v1154 = vld [vmem:[%s5 + $0x168] sm:$0xff]
  %v1155 = vld [vmem:[%s5 + $0x170] sm:$0xff]
  %v1156 = vld [vmem:[%s5 + $0x178] sm:$0xff]
  %v1157 = vld [vmem:[%s5 + $0x180] sm:$0xff]
  %v1158 = vld [vmem:[%s5 + $0x188] sm:$0xff]
  %v1159 = vld [vmem:[%s5 + $0x190] sm:$0xff]
  %v1160 = vld [vmem:[%s5 + $0x198] sm:$0xff]
  %v1161 = vld [vmem:[%s5 + $0x1a0] sm:$0xff]
  %v1162 = vld [vmem:[%s5 + $0x1a8] sm:$0xff]
  %v1163 = vld [vmem:[%s5 + $0x1b0] sm:$0xff]
  %v1164 = vld [vmem:[%s5 + $0x1b8] sm:$0xff]
  %v1165 = vld [vmem:[%s5 + $0x1c0] sm:$0xff]
  %v1166 = vld [vmem:[%s5 + $0x1c8] sm:$0xff]
  %v1167 = vld [vmem:[%s5 + $0x1d0] sm:$0xff]
  %v1168 = vld [vmem:[%s5 + $0x1d8] sm:$0xff]
  %v1169 = vld [vmem:[%s5 + $0x1e0] sm:$0xff]
  %v1170 = vld [vmem:[%s5 + $0x1e8] sm:$0xff]
  %v1171 = vld [vmem:[%s5 + $0x1f0] sm:$0xff]
  %v1172 = vld [vmem:[%s5 + $0x1f8] sm:$0xff]
  %v1173 = vld [vmem:[%s5 + $0x200] sm:$0xff]
  %v1174 = vld [vmem:[%s5 + $0x208] sm:$0xff]
  %v1175 = vld [vmem:[%s5 + $0x210] sm:$0xff]
  %v1176 = vld [vmem:[%s5 + $0x218] sm:$0xff]
  %v1177 = vld [vmem:[%s5 + $0x220] sm:$0xff]
  %v1178 = vld [vmem:[%s5 + $0x228] sm:$0xff]
  %v1179 = vld [vmem:[%s5 + $0x230] sm:$0xff]
  %v1180 = vld [vmem:[%s5 + $0x238] sm:$0xff]
  %v1181 = vld [vmem:[%s5 + $0x240] sm:$0xff]
  %v1182 = vld [vmem:[%s5 + $0x248] sm:$0xff]
  %v1183 = vld [vmem:[%s5 + $0x250] sm:$0xff]
  %v1184 = vld [vmem:[%s5 + $0x258] sm:$0xff]
  %v1185 = vld [vmem:[%s5 + $0x260] sm:$0xff]
  %v1186 = vld [vmem:[%s5 + $0x268] sm:$0xff]
  %v1187 = vld [vmem:[%s5 + $0x270] sm:$0xff]
  %v1188 = vld [vmem:[%s5 + $0x278] sm:$0xff]
  %v1189 = vld [vmem:[%s5 + $0x280] sm:$0xff]
  %v1190 = vld [vmem:[%s5 + $0x288] sm:$0xff]
  %v1191 = vld [vmem:[%s5 + $0x290] sm:$0xff]
  %v1192 = vld [vmem:[%s5 + $0x298] sm:$0xff]
  %v1193 = vld [vmem:[%s5 + $0x2a0] sm:$0xff]
  %v1194 = vld [vmem:[%s5 + $0x2a8] sm:$0xff]
  %v1195 = vld [vmem:[%s5 + $0x2b0] sm:$0xff]
  %v1196 = vld [vmem:[%s5 + $0x2b8] sm:$0xff]
  %v1197 = vld [vmem:[%s5 + $0x2c0] sm:$0xff]
  %v1198 = vld [vmem:[%s5 + $0x2c8] sm:$0xff]
  %v1199 = vld [vmem:[%s5 + $0x2d0] sm:$0xff]
  %v1200 = vld [vmem:[%s5 + $0x2d8] sm:$0xff]
  %v1201 = vld [vmem:[%s5 + $0x2e0] sm:$0xff]
  %v1202 = vld [vmem:[%s5 + $0x2e8] sm:$0xff]
  %v1203 = vld [vmem:[%s5 + $0x2f0] sm:$0xff]
  %v1204 = vld [vmem:[%s5 + $0x2f8] sm:$0xff]
  %v1205 = vld [vmem:[%s5 + $0x300] sm:$0xff]
  %v1206 = vld [vmem:[%s5 + $0x308] sm:$0xff]
  %v1207 = vld [vmem:[%s5 + $0x310] sm:$0xff]
  %v1208 = vld [vmem:[%s5 + $0x318] sm:$0xff]
  %v1209 = vld [vmem:[%s5 + $0x320] sm:$0xff]
  %v1210 = vld [vmem:[%s5 + $0x328] sm:$0xff]
  %v1211 = vld [vmem:[%s5 + $0x330] sm:$0xff]
  %v1212 = vld [vmem:[%s5 + $0x338] sm:$0xff]
  %v1213 = vld [vmem:[%s5 + $0x340] sm:$0xff]
  %v1214 = vld [vmem:[%s5 + $0x348] sm:$0xff]
  %v1215 = vld [vmem:[%s5 + $0x350] sm:$0xff]
  %v1216 = vld [vmem:[%s5 + $0x358] sm:$0xff]
  %v1217 = vld [vmem:[%s5 + $0x360] sm:$0xff]
  %v1218 = vld [vmem:[%s5 + $0x368] sm:$0xff]
  %v1219 = vld [vmem:[%s5 + $0x370] sm:$0xff]
  %v1220 = vld [vmem:[%s5 + $0x378] sm:$0xff]
  %v1221 = vld [vmem:[%s5 + $0x380] sm:$0xff]
  %v1222 = vld [vmem:[%s5 + $0x388] sm:$0xff]
  %v1223 = vld [vmem:[%s5 + $0x390] sm:$0xff]
  %v1224 = vld [vmem:[%s5 + $0x398] sm:$0xff]
  %v1225 = vld [vmem:[%s5 + $0x3a0] sm:$0xff]
  %v1226 = vld [vmem:[%s5 + $0x3a8] sm:$0xff]
  %v1227 = vld [vmem:[%s5 + $0x3b0] sm:$0xff]
  %v1228 = vld [vmem:[%s5 + $0x3b8] sm:$0xff]
  %v1229 = vld [vmem:[%s5 + $0x3c0] sm:$0xff]
  %v1230 = vld [vmem:[%s5 + $0x3c8] sm:$0xff]
  %v1231 = vld [vmem:[%s5 + $0x3d0] sm:$0xff]
  %v1232 = vld [vmem:[%s5 + $0x3d8] sm:$0xff]
  %v1233 = vld [vmem:[%s5 + $0x3e0] sm:$0xff]
  %v1234 = vld [vmem:[%s5 + $0x3e8] sm:$0xff]
  %v1235 = vld [vmem:[%s5 + $0x3f0] sm:$0xff]
  %v1236 = vld [vmem:[%s5 + $0x3f8] sm:$0xff]
  %v1237 = vld [vmem:[%s5 + $0x400] sm:$0xff]
  %v1238 = vld [vmem:[%s5 + $0x408] sm:$0xff]
  %v1239 = vld [vmem:[%s5 + $0x410] sm:$0xff]
  %v1240 = vld [vmem:[%s5 + $0x418] sm:$0xff]
  %v1241 = vld [vmem:[%s5 + $0x420] sm:$0xff]
  %v1242 = vld [vmem:[%s5 + $0x428] sm:$0xff]
  %v1243 = vld [vmem:[%s5 + $0x430] sm:$0xff]
  %v1244 = vld [vmem:[%s5 + $0x438] sm:$0xff]
  %v1245 = vld [vmem:[%s5 + $0x440] sm:$0xff]
  %v1246 = vld [vmem:[%s5 + $0x448] sm:$0xff]
  %v1247 = vld [vmem:[%s5 + $0x450] sm:$0xff]
  %v1248 = vld [vmem:[%s5 + $0x458] sm:$0xff]
  %v1249 = vld [vmem:[%s5 + $0x460] sm:$0xff]
  %v1250 = vld [vmem:[%s5 + $0x468] sm:$0xff]
  %v1251 = vld [vmem:[%s5 + $0x470] sm:$0xff]
  %v1252 = vld [vmem:[%s5 + $0x478] sm:$0xff]
  %v1253 = vld [vmem:[%s5 + $0x480] sm:$0xff]
  %v1254 = vld [vmem:[%s5 + $0x488] sm:$0xff]
  %v1255 = vld [vmem:[%s5 + $0x490] sm:$0xff]
  %v1256 = vld [vmem:[%s5 + $0x498] sm:$0xff]
  %v1257 = vld [vmem:[%s5 + $0x4a0] sm:$0xff]
  %v1258 = vld [vmem:[%s5 + $0x4a8] sm:$0xff]
  %v1259 = vld [vmem:[%s5 + $0x4b0] sm:$0xff]
  %v1260 = vld [vmem:[%s5 + $0x4b8] sm:$0xff]
  %v1261 = vld [vmem:[%s5 + $0x4c0] sm:$0xff]
  %v1262 = vld [vmem:[%s5 + $0x4c8] sm:$0xff]
  %v1263 = vld [vmem:[%s5 + $0x4d0] sm:$0xff]
  %v1264 = vld [vmem:[%s5 + $0x4d8] sm:$0xff]
  %v1265 = vld [vmem:[%s5 + $0x4e0] sm:$0xff]
  %v1266 = vld [vmem:[%s5 + $0x4e8] sm:$0xff]
  %v1267 = vld [vmem:[%s5 + $0x4f0] sm:$0xff]
  %v1268 = vld [vmem:[%s5 + $0x4f8] sm:$0xff]
  %v1269 = vld [vmem:[%s5 + $0x500] sm:$0xff]
  %v1270 = vld [vmem:[%s5 + $0x508] sm:$0xff]
  %v1271 = vld [vmem:[%s5 + $0x510] sm:$0xff]
  %v1272 = vld [vmem:[%s5 + $0x518] sm:$0xff]
  %v1273 = vld [vmem:[%s5 + $0x520] sm:$0xff]
  %v1274 = vld [vmem:[%s5 + $0x528] sm:$0xff]
  %v1275 = vld [vmem:[%s5 + $0x530] sm:$0xff]
  %v1276 = vld [vmem:[%s5 + $0x538] sm:$0xff]
  %v1277 = vld [vmem:[%s5 + $0x540] sm:$0xff]
  %v1278 = vld [vmem:[%s5 + $0x548] sm:$0xff]
  %v1279 = vld [vmem:[%s5 + $0x550] sm:$0xff]
  %v1280 = vld [vmem:[%s5 + $0x558] sm:$0xff]
  %v1281 = vld [vmem:[%s5 + $0x560] sm:$0xff]
  %v1282 = vld [vmem:[%s5 + $0x568] sm:$0xff]
  %v1283 = vld [vmem:[%s5 + $0x570] sm:$0xff]
  %v1284 = vld [vmem:[%s5 + $0x578] sm:$0xff]
  %v1285 = vld [vmem:[%s5 + $0x580] sm:$0xff]
  %v1286 = vld [vmem:[%s5 + $0x588] sm:$0xff]
  %v1287 = vld [vmem:[%s5 + $0x590] sm:$0xff]
  %v1288 = vld [vmem:[%s5 + $0x598] sm:$0xff]
  %v1289 = vld [vmem:[%s5 + $0x5a0] sm:$0xff]
  %v1290 = vld [vmem:[%s5 + $0x5a8] sm:$0xff]
  %v1291 = vld [vmem:[%s5 + $0x5b0] sm:$0xff]
  %v1292 = vld [vmem:[%s5 + $0x5b8] sm:$0xff]
  %v1293 = vld [vmem:[%s5 + $0x5c0] sm:$0xff]
  %v1294 = vld [vmem:[%s5 + $0x5c8] sm:$0xff]
  %v1295 = vld [vmem:[%s5 + $0x5d0] sm:$0xff]
  %v1296 = vld [vmem:[%s5 + $0x5d8] sm:$0xff]
  %v1297 = vld [vmem:[%s5 + $0x5e0] sm:$0xff]
  %v1298 = vld [vmem:[%s5 + $0x5e8] sm:$0xff]
  %v1299 = vld [vmem:[%s5 + $0x5f0] sm:$0xff]
  %v1300 = vld [vmem:[%s5 + $0x5f8] sm:$0xff]
  %v1301 = vld [vmem:[%s5 + $0x600] sm:$0xff]
  %v1302 = vld [vmem:[%s5 + $0x608] sm:$0xff]
  %v1303 = vld [vmem:[%s5 + $0x610] sm:$0xff]
  %v1304 = vld [vmem:[%s5 + $0x618] sm:$0xff]
  %v1305 = vld [vmem:[%s5 + $0x620] sm:$0xff]
  %v1306 = vld [vmem:[%s5 + $0x628] sm:$0xff]
  %v1307 = vld [vmem:[%s5 + $0x630] sm:$0xff]
  %v1308 = vld [vmem:[%s5 + $0x638] sm:$0xff]
  %v1309 = vld [vmem:[%s5 + $0x640] sm:$0xff]
  %v1310 = vld [vmem:[%s5 + $0x648] sm:$0xff]
  %v1311 = vld [vmem:[%s5 + $0x650] sm:$0xff]
  %v1312 = vld [vmem:[%s5 + $0x658] sm:$0xff]
  %v1313 = vld [vmem:[%s5 + $0x660] sm:$0xff]
  %v1314 = vld [vmem:[%s5 + $0x668] sm:$0xff]
  %v1315 = vld [vmem:[%s5 + $0x670] sm:$0xff]
  %v1316 = vld [vmem:[%s5 + $0x678] sm:$0xff]
  %v1317 = vld [vmem:[%s5 + $0x680] sm:$0xff]
  %v1318 = vld [vmem:[%s5 + $0x688] sm:$0xff]
  %v1319 = vld [vmem:[%s5 + $0x690] sm:$0xff]
  %v1320 = vld [vmem:[%s5 + $0x698] sm:$0xff]
  %v1321 = vld [vmem:[%s5 + $0x6a0] sm:$0xff]
  %v1322 = vld [vmem:[%s5 + $0x6a8] sm:$0xff]
  %v1323 = vld [vmem:[%s5 + $0x6b0] sm:$0xff]
  %v1324 = vld [vmem:[%s5 + $0x6b8] sm:$0xff]
  %v1325 = vld [vmem:[%s5 + $0x6c0] sm:$0xff]
  %v1326 = vld [vmem:[%s5 + $0x6c8] sm:$0xff]
  %v1327 = vld [vmem:[%s5 + $0x6d0] sm:$0xff]
  %v1328 = vld [vmem:[%s5 + $0x6d8] sm:$0xff]
  %v1329 = vld [vmem:[%s5 + $0x6e0] sm:$0xff]
  %v1330 = vld [vmem:[%s5 + $0x6e8] sm:$0xff]
  %v1331 = vld [vmem:[%s5 + $0x6f0] sm:$0xff]
  %v1332 = vld [vmem:[%s5 + $0x6f8] sm:$0xff]
  %v1333 = vld [vmem:[%s5 + $0x700] sm:$0xff]
  %v1334 = vld [vmem:[%s5 + $0x708] sm:$0xff]
  %v1335 = vld [vmem:[%s5 + $0x710] sm:$0xff]
  %v1336 = vld [vmem:[%s5 + $0x718] sm:$0xff]
  %v1337 = vld [vmem:[%s5 + $0x720] sm:$0xff]
  %v1338 = vld [vmem:[%s5 + $0x728] sm:$0xff]
  %v1339 = vld [vmem:[%s5 + $0x730] sm:$0xff]
  %v1340 = vld [vmem:[%s5 + $0x738] sm:$0xff]
  %v1341 = vld [vmem:[%s5 + $0x740] sm:$0xff]
  %v1342 = vld [vmem:[%s5 + $0x748] sm:$0xff]
  %v1343 = vld [vmem:[%s5 + $0x750] sm:$0xff]
  %v1344 = vld [vmem:[%s5 + $0x758] sm:$0xff]
  %v1345 = vld [vmem:[%s5 + $0x760] sm:$0xff]
  %v1346 = vld [vmem:[%s5 + $0x768] sm:$0xff]
  %v1347 = vld [vmem:[%s5 + $0x770] sm:$0xff]
  %v1348 = vld [vmem:[%s5 + $0x778] sm:$0xff]
  %v1349 = vld [vmem:[%s5 + $0x780] sm:$0xff]
  %v1350 = vld [vmem:[%s5 + $0x788] sm:$0xff]
  %v1351 = vld [vmem:[%s5 + $0x790] sm:$0xff]
  %v1352 = vld [vmem:[%s5 + $0x798] sm:$0xff]
  %v1353 = vld [vmem:[%s5 + $0x7a0] sm:$0xff]
  %v1354 = vld [vmem:[%s5 + $0x7a8] sm:$0xff]
  %v1355 = vld [vmem:[%s5 + $0x7b0] sm:$0xff]
  %v1356 = vld [vmem:[%s5 + $0x7b8] sm:$0xff]
  %v1357 = vld [vmem:[%s5 + $0x7c0] sm:$0xff]
  %v1358 = vld [vmem:[%s5 + $0x7c8] sm:$0xff]
  %v1359 = vld [vmem:[%s5 + $0x7d0] sm:$0xff]
  %v1360 = vld [vmem:[%s5 + $0x7d8] sm:$0xff]
  %v1361 = vld [vmem:[%s5 + $0x7e0] sm:$0xff]
  %v1362 = vld [vmem:[%s5 + $0x7e8] sm:$0xff]
  %v1363 = vld [vmem:[%s5 + $0x7f0] sm:$0xff]
  %v1364 = vld [vmem:[%s5 + $0x7f8] sm:$0xff]
  %v1365 = vld [vmem:[%s6] sm:$0x1]
  %v1367 = vlaneseq
  %v1368 = vshrl.u32 %v1367, 7
  %v1369 = vsub.s32 0, %v1368
  %v1370 = vrot.slane %v1365, %v1369
  %1372 = vmatprep.subr.mxu0 0.0
  %1373 = vmatpush1.msra.mxu0 %v1124
  %1374 = vmatprep.subr.mxu0 0.0
  %1375 = vmatpush1.msra.mxu0 %v1123
  %1376 = vmatprep.subr.mxu0 0.0
  %1377 = vmatpush1.msra.mxu0 %v1122
  %1378 = vmatprep.subr.mxu0 0.0
  %1379 = vmatpush1.msra.mxu0 %v1121
  %1380 = vmatprep.subr.mxu0 0.0
  %1381 = vmatpush1.msra.mxu0 %v1120
  %1382 = vmatprep.subr.mxu0 0.0
  %1383 = vmatpush1.msra.mxu0 %v1119
  %1384 = vmatprep.subr.mxu0 0.0
  %1385 = vmatpush1.msra.mxu0 %v1118
  %1386 = vmatprep.subr.mxu0 0.0
  %1387 = vmatpush1.msra.mxu0 %v1117
  %1388 = vmatprep.subr.mxu0 0.0
  %1389 = vmatpush1.msra.mxu0 %v1116
  %1390 = vmatprep.subr.mxu0 0.0
  %1391 = vmatpush1.msra.mxu0 %v1115
  %1392 = vmatprep.subr.mxu0 0.0
  %1393 = vmatpush1.msra.mxu0 %v1114
  %1394 = vmatprep.subr.mxu0 0.0
  %1395 = vmatpush1.msra.mxu0 %v1113
  %1396 = vmatprep.subr.mxu0 0.0
  %1397 = vmatpush1.msra.mxu0 %v1112
  %1398 = vmatprep.subr.mxu0 0.0
  %1399 = vmatpush1.msra.mxu0 %v1111
  %1400 = vmatprep.subr.mxu0 0.0
  %1401 = vmatpush1.msra.mxu0 %v1110
  %1402 = vmatprep.subr.mxu0 0.0
  %1403 = vmatpush1.msra.mxu0 %v1109
  %1404 = vmatprep.subr.mxu0 0.0
  %1405 = vmatpush2.msra.mxu0 %v1140
  %1406 = vmatprep.subr.mxu0 0.0
  %1407 = vmatpush2.msra.mxu0 %v1139
  %1408 = vmatprep.subr.mxu0 0.0
  %1409 = vmatpush2.msra.mxu0 %v1138
  %1410 = vmatprep.subr.mxu0 0.0
  %1411 = vmatpush2.msra.mxu0 %v1137
  %1412 = vmatprep.subr.mxu0 0.0
  %1413 = vmatpush2.msra.mxu0 %v1136
  %1414 = vmatprep.subr.mxu0 0.0
  %1415 = vmatpush2.msra.mxu0 %v1135
  %1416 = vmatprep.subr.mxu0 0.0
  %1417 = vmatpush2.msra.mxu0 %v1134
  %1418 = vmatprep.subr.mxu0 0.0
  %1419 = vmatpush2.msra.mxu0 %v1133
  %1420 = vmatprep.subr.mxu0 0.0
  %1421 = vmatpush2.msra.mxu0 %v1132
  %1422 = vmatprep.subr.mxu0 0.0
  %1423 = vmatpush2.msra.mxu0 %v1131
  %1424 = vmatprep.subr.mxu0 0.0
  %1425 = vmatpush2.msra.mxu0 %v1130
  %1426 = vmatprep.subr.mxu0 0.0
  %1427 = vmatpush2.msra.mxu0 %v1129
  %1428 = vmatprep.subr.mxu0 0.0
  %1429 = vmatpush2.msra.mxu0 %v1128
  %1430 = vmatprep.subr.mxu0 0.0
  %1431 = vmatpush2.msra.mxu0 %v1127
  %1432 = vmatprep.subr.mxu0 0.0
  %1433 = vmatpush2.msra.mxu0 %v1126
  %1434 = vmatprep.subr.mxu0 0.0
  %1435 = vmatpush2.msra.mxu0 %v1125
  %1436 = vmatprep.mubr.f32.mxu0 %v1094
  %1437 = vmatmul.mubr.f32.gmra.mxu0 %v1093
  %v1438 = vpop.f32.mrf.mxu0
  %v1439 = vadd.f32 %v1370, %v1438
  %v1440 = vpop.f32.mrf.mxu0
  %1441 = vdwg.mxu0
  %1442 = vmatprep.subr.mxu0 0.0
  %1443 = vmatpush1.msra.mxu0 %v1156
  %1444 = vmatprep.subr.mxu0 0.0
  %1445 = vmatpush1.msra.mxu0 %v1155
  %1446 = vmatprep.subr.mxu0 0.0
  %1447 = vmatpush1.msra.mxu0 %v1154
  %1448 = vmatprep.subr.mxu0 0.0
  %1449 = vmatpush1.msra.mxu0 %v1153
  %1450 = vmatprep.subr.mxu0 0.0
  %1451 = vmatpush1.msra.mxu0 %v1152
  %1452 = vmatprep.subr.mxu0 0.0
  %1453 = vmatpush1.msra.mxu0 %v1151
  %1454 = vmatprep.subr.mxu0 0.0
  %1455 = vmatpush1.msra.mxu0 %v1150
  %1456 = vmatprep.subr.mxu0 0.0
  %1457 = vmatpush1.msra.mxu0 %v1149
  %1458 = vmatprep.subr.mxu0 0.0
  %1459 = vmatpush1.msra.mxu0 %v1148
  %1460 = vmatprep.subr.mxu0 0.0
  %1461 = vmatpush1.msra.mxu0 %v1147
  %1462 = vmatprep.subr.mxu0 0.0
  %1463 = vmatpush1.msra.mxu0 %v1146
  %1464 = vmatprep.subr.mxu0 0.0
  %1465 = vmatpush1.msra.mxu0 %v1145
  %1466 = vmatprep.subr.mxu0 0.0
  %1467 = vmatpush1.msra.mxu0 %v1144
  %1468 = vmatprep.subr.mxu0 0.0
  %1469 = vmatpush1.msra.mxu0 %v1143
  %1470 = vmatprep.subr.mxu0 0.0
  %1471 = vmatpush1.msra.mxu0 %v1142
  %1472 = vmatprep.subr.mxu0 0.0
  %1473 = vmatpush1.msra.mxu0 %v1141
  %1474 = vmatprep.subr.mxu0 0.0
  %1475 = vmatpush2.msra.mxu0 %v1172
  %1476 = vmatprep.subr.mxu0 0.0
  %1477 = vmatpush2.msra.mxu0 %v1171
  %1478 = vmatprep.subr.mxu0 0.0
  %1479 = vmatpush2.msra.mxu0 %v1170
  %1480 = vmatprep.subr.mxu0 0.0
  %1481 = vmatpush2.msra.mxu0 %v1169
  %1482 = vmatprep.subr.mxu0 0.0
  %1483 = vmatpush2.msra.mxu0 %v1168
  %1484 = vmatprep.subr.mxu0 0.0
  %1485 = vmatpush2.msra.mxu0 %v1167
  %1486 = vmatprep.subr.mxu0 0.0
  %1487 = vmatpush2.msra.mxu0 %v1166
  %1488 = vmatprep.subr.mxu0 0.0
  %1489 = vmatpush2.msra.mxu0 %v1165
  %1490 = vmatprep.subr.mxu0 0.0
  %1491 = vmatpush2.msra.mxu0 %v1164
  %1492 = vmatprep.subr.mxu0 0.0
  %1493 = vmatpush2.msra.mxu0 %v1163
  %1494 = vmatprep.subr.mxu0 0.0
  %1495 = vmatpush2.msra.mxu0 %v1162
  %1496 = vmatprep.subr.mxu0 0.0
  %1497 = vmatpush2.msra.mxu0 %v1161
  %1498 = vmatprep.subr.mxu0 0.0
  %1499 = vmatpush2.msra.mxu0 %v1160
  %1500 = vmatprep.subr.mxu0 0.0
  %1501 = vmatpush2.msra.mxu0 %v1159
  %1502 = vmatprep.subr.mxu0 0.0
  %1503 = vmatpush2.msra.mxu0 %v1158
  %1504 = vmatprep.subr.mxu0 0.0
  %1505 = vmatpush2.msra.mxu0 %v1157
  %1506 = vmatprep.mubr.f32.mxu0 %v1096
  %1507 = vmatmul.mubr.f32.gmra.mxu0 %v1095
  %v1508 = vpop.f32.mrf.mxu0
  %v1509 = vadd.f32 %v1439, %v1508
  %v1510 = vpop.f32.mrf.mxu0
  %1511 = vdwg.mxu0
  %1512 = vmatprep.subr.mxu0 0.0
  %1513 = vmatpush1.msra.mxu0 %v1188
  %1514 = vmatprep.subr.mxu0 0.0
  %1515 = vmatpush1.msra.mxu0 %v1187
  %1516 = vmatprep.subr.mxu0 0.0
  %1517 = vmatpush1.msra.mxu0 %v1186
  %1518 = vmatprep.subr.mxu0 0.0
  %1519 = vmatpush1.msra.mxu0 %v1185
  %1520 = vmatprep.subr.mxu0 0.0
  %1521 = vmatpush1.msra.mxu0 %v1184
  %1522 = vmatprep.subr.mxu0 0.0
  %1523 = vmatpush1.msra.mxu0 %v1183
  %1524 = vmatprep.subr.mxu0 0.0
  %1525 = vmatpush1.msra.mxu0 %v1182
  %1526 = vmatprep.subr.mxu0 0.0
  %1527 = vmatpush1.msra.mxu0 %v1181
  %1528 = vmatprep.subr.mxu0 0.0
  %1529 = vmatpush1.msra.mxu0 %v1180
  %1530 = vmatprep.subr.mxu0 0.0
  %1531 = vmatpush1.msra.mxu0 %v1179
  %1532 = vmatprep.subr.mxu0 0.0
  %1533 = vmatpush1.msra.mxu0 %v1178
  %1534 = vmatprep.subr.mxu0 0.0
  %1535 = vmatpush1.msra.mxu0 %v1177
  %1536 = vmatprep.subr.mxu0 0.0
  %1537 = vmatpush1.msra.mxu0 %v1176
  %1538 = vmatprep.subr.mxu0 0.0
  %1539 = vmatpush1.msra.mxu0 %v1175
  %1540 = vmatprep.subr.mxu0 0.0
  %1541 = vmatpush1.msra.mxu0 %v1174
  %1542 = vmatprep.subr.mxu0 0.0
  %1543 = vmatpush1.msra.mxu0 %v1173
  %1544 = vmatprep.subr.mxu0 0.0
  %1545 = vmatpush2.msra.mxu0 %v1204
  %1546 = vmatprep.subr.mxu0 0.0
  %1547 = vmatpush2.msra.mxu0 %v1203
  %1548 = vmatprep.subr.mxu0 0.0
  %1549 = vmatpush2.msra.mxu0 %v1202
  %1550 = vmatprep.subr.mxu0 0.0
  %1551 = vmatpush2.msra.mxu0 %v1201
  %1552 = vmatprep.subr.mxu0 0.0
  %1553 = vmatpush2.msra.mxu0 %v1200
  %1554 = vmatprep.subr.mxu0 0.0
  %1555 = vmatpush2.msra.mxu0 %v1199
  %1556 = vmatprep.subr.mxu0 0.0
  %1557 = vmatpush2.msra.mxu0 %v1198
  %1558 = vmatprep.subr.mxu0 0.0
  %1559 = vmatpush2.msra.mxu0 %v1197
  %1560 = vmatprep.subr.mxu0 0.0
  %1561 = vmatpush2.msra.mxu0 %v1196
  %1562 = vmatprep.subr.mxu0 0.0
  %1563 = vmatpush2.msra.mxu0 %v1195
  %1564 = vmatprep.subr.mxu0 0.0
  %1565 = vmatpush2.msra.mxu0 %v1194
  %1566 = vmatprep.subr.mxu0 0.0
  %1567 = vmatpush2.msra.mxu0 %v1193
  %1568 = vmatprep.subr.mxu0 0.0
  %1569 = vmatpush2.msra.mxu0 %v1192
  %1570 = vmatprep.subr.mxu0 0.0
  %1571 = vmatpush2.msra.mxu0 %v1191
  %1572 = vmatprep.subr.mxu0 0.0
  %1573 = vmatpush2.msra.mxu0 %v1190
  %1574 = vmatprep.subr.mxu0 0.0
  %1575 = vmatpush2.msra.mxu0 %v1189
  %1576 = vmatprep.mubr.f32.mxu0 %v1098
  %1577 = vmatmul.mubr.f32.gmra.mxu0 %v1097
  %v1578 = vpop.f32.mrf.mxu0
  %v1579 = vadd.f32 %v1509, %v1578
  %v1580 = vpop.f32.mrf.mxu0
  %1581 = vdwg.mxu0
  %1582 = vmatprep.subr.mxu0 0.0
  %1583 = vmatpush1.msra.mxu0 %v1220
  %1584 = vmatprep.subr.mxu0 0.0
  %1585 = vmatpush1.msra.mxu0 %v1219
  %1586 = vmatprep.subr.mxu0 0.0
  %1587 = vmatpush1.msra.mxu0 %v1218
  %1588 = vmatprep.subr.mxu0 0.0
  %1589 = vmatpush1.msra.mxu0 %v1217
  %1590 = vmatprep.subr.mxu0 0.0
  %1591 = vmatpush1.msra.mxu0 %v1216
  %1592 = vmatprep.subr.mxu0 0.0
  %1593 = vmatpush1.msra.mxu0 %v1215
  %1594 = vmatprep.subr.mxu0 0.0
  %1595 = vmatpush1.msra.mxu0 %v1214
  %1596 = vmatprep.subr.mxu0 0.0
  %1597 = vmatpush1.msra.mxu0 %v1213
  %1598 = vmatprep.subr.mxu0 0.0
  %1599 = vmatpush1.msra.mxu0 %v1212
  %1600 = vmatprep.subr.mxu0 0.0
  %1601 = vmatpush1.msra.mxu0 %v1211
  %1602 = vmatprep.subr.mxu0 0.0
  %1603 = vmatpush1.msra.mxu0 %v1210
  %1604 = vmatprep.subr.mxu0 0.0
  %1605 = vmatpush1.msra.mxu0 %v1209
  %1606 = vmatprep.subr.mxu0 0.0
  %1607 = vmatpush1.msra.mxu0 %v1208
  %1608 = vmatprep.subr.mxu0 0.0
  %1609 = vmatpush1.msra.mxu0 %v1207
  %1610 = vmatprep.subr.mxu0 0.0
  %1611 = vmatpush1.msra.mxu0 %v1206
  %1612 = vmatprep.subr.mxu0 0.0
  %1613 = vmatpush1.msra.mxu0 %v1205
  %1614 = vmatprep.subr.mxu0 0.0
  %1615 = vmatpush2.msra.mxu0 %v1236
  %1616 = vmatprep.subr.mxu0 0.0
  %1617 = vmatpush2.msra.mxu0 %v1235
  %1618 = vmatprep.subr.mxu0 0.0
  %1619 = vmatpush2.msra.mxu0 %v1234
  %1620 = vmatprep.subr.mxu0 0.0
  %1621 = vmatpush2.msra.mxu0 %v1233
  %1622 = vmatprep.subr.mxu0 0.0
  %1623 = vmatpush2.msra.mxu0 %v1232
  %1624 = vmatprep.subr.mxu0 0.0
  %1625 = vmatpush2.msra.mxu0 %v1231
  %1626 = vmatprep.subr.mxu0 0.0
  %1627 = vmatpush2.msra.mxu0 %v1230
  %1628 = vmatprep.subr.mxu0 0.0
  %1629 = vmatpush2.msra.mxu0 %v1229
  %1630 = vmatprep.subr.mxu0 0.0
  %1631 = vmatpush2.msra.mxu0 %v1228
  %1632 = vmatprep.subr.mxu0 0.0
  %1633 = vmatpush2.msra.mxu0 %v1227
  %1634 = vmatprep.subr.mxu0 0.0
  %1635 = vmatpush2.msra.mxu0 %v1226
  %1636 = vmatprep.subr.mxu0 0.0
  %1637 = vmatpush2.msra.mxu0 %v1225
  %1638 = vmatprep.subr.mxu0 0.0
  %1639 = vmatpush2.msra.mxu0 %v1224
  %1640 = vmatprep.subr.mxu0 0.0
  %1641 = vmatpush2.msra.mxu0 %v1223
  %1642 = vmatprep.subr.mxu0 0.0
  %1643 = vmatpush2.msra.mxu0 %v1222
  %1644 = vmatprep.subr.mxu0 0.0
  %1645 = vmatpush2.msra.mxu0 %v1221
  %1646 = vmatprep.mubr.f32.mxu0 %v1100
  %1647 = vmatmul.mubr.f32.gmra.mxu0 %v1099
  %v1648 = vpop.f32.mrf.mxu0
  %v1649 = vadd.f32 %v1579, %v1648
  %v1650 = vpop.f32.mrf.mxu0
  %1651 = vdwg.mxu0
  %1652 = vmatprep.subr.mxu0 0.0
  %1653 = vmatpush1.msra.mxu0 %v1252
  %1654 = vmatprep.subr.mxu0 0.0
  %1655 = vmatpush1.msra.mxu0 %v1251
  %1656 = vmatprep.subr.mxu0 0.0
  %1657 = vmatpush1.msra.mxu0 %v1250
  %1658 = vmatprep.subr.mxu0 0.0
  %1659 = vmatpush1.msra.mxu0 %v1249
  %1660 = vmatprep.subr.mxu0 0.0
  %1661 = vmatpush1.msra.mxu0 %v1248
  %1662 = vmatprep.subr.mxu0 0.0
  %1663 = vmatpush1.msra.mxu0 %v1247
  %1664 = vmatprep.subr.mxu0 0.0
  %1665 = vmatpush1.msra.mxu0 %v1246
  %1666 = vmatprep.subr.mxu0 0.0
  %1667 = vmatpush1.msra.mxu0 %v1245
  %1668 = vmatprep.subr.mxu0 0.0
  %1669 = vmatpush1.msra.mxu0 %v1244
  %1670 = vmatprep.subr.mxu0 0.0
  %1671 = vmatpush1.msra.mxu0 %v1243
  %1672 = vmatprep.subr.mxu0 0.0
  %1673 = vmatpush1.msra.mxu0 %v1242
  %1674 = vmatprep.subr.mxu0 0.0
  %1675 = vmatpush1.msra.mxu0 %v1241
  %1676 = vmatprep.subr.mxu0 0.0
  %1677 = vmatpush1.msra.mxu0 %v1240
  %1678 = vmatprep.subr.mxu0 0.0
  %1679 = vmatpush1.msra.mxu0 %v1239
  %1680 = vmatprep.subr.mxu0 0.0
  %1681 = vmatpush1.msra.mxu0 %v1238
  %1682 = vmatprep.subr.mxu0 0.0
  %1683 = vmatpush1.msra.mxu0 %v1237
  %1684 = vmatprep.subr.mxu0 0.0
  %1685 = vmatpush2.msra.mxu0 %v1268
  %1686 = vmatprep.subr.mxu0 0.0
  %1687 = vmatpush2.msra.mxu0 %v1267
  %1688 = vmatprep.subr.mxu0 0.0
  %1689 = vmatpush2.msra.mxu0 %v1266
  %1690 = vmatprep.subr.mxu0 0.0
  %1691 = vmatpush2.msra.mxu0 %v1265
  %1692 = vmatprep.subr.mxu0 0.0
  %1693 = vmatpush2.msra.mxu0 %v1264
  %1694 = vmatprep.subr.mxu0 0.0
  %1695 = vmatpush2.msra.mxu0 %v1263
  %1696 = vmatprep.subr.mxu0 0.0
  %1697 = vmatpush2.msra.mxu0 %v1262
  %1698 = vmatprep.subr.mxu0 0.0
  %1699 = vmatpush2.msra.mxu0 %v1261
  %1700 = vmatprep.subr.mxu0 0.0
  %1701 = vmatpush2.msra.mxu0 %v1260
  %1702 = vmatprep.subr.mxu0 0.0
  %1703 = vmatpush2.msra.mxu0 %v1259
  %1704 = vmatprep.subr.mxu0 0.0
  %1705 = vmatpush2.msra.mxu0 %v1258
  %1706 = vmatprep.subr.mxu0 0.0
  %1707 = vmatpush2.msra.mxu0 %v1257
  %1708 = vmatprep.subr.mxu0 0.0
  %1709 = vmatpush2.msra.mxu0 %v1256
  %1710 = vmatprep.subr.mxu0 0.0
  %1711 = vmatpush2.msra.mxu0 %v1255
  %1712 = vmatprep.subr.mxu0 0.0
  %1713 = vmatpush2.msra.mxu0 %v1254
  %1714 = vmatprep.subr.mxu0 0.0
  %1715 = vmatpush2.msra.mxu0 %v1253
  %1716 = vmatprep.mubr.f32.mxu0 %v1102
  %1717 = vmatmul.mubr.f32.gmra.mxu0 %v1101
  %v1718 = vpop.f32.mrf.mxu0
  %v1719 = vadd.f32 %v1649, %v1718
  %v1720 = vpop.f32.mrf.mxu0
  %1721 = vdwg.mxu0
  %1722 = vmatprep.subr.mxu0 0.0
  %1723 = vmatpush1.msra.mxu0 %v1284
  %1724 = vmatprep.subr.mxu0 0.0
  %1725 = vmatpush1.msra.mxu0 %v1283
  %1726 = vmatprep.subr.mxu0 0.0
  %1727 = vmatpush1.msra.mxu0 %v1282
  %1728 = vmatprep.subr.mxu0 0.0
  %1729 = vmatpush1.msra.mxu0 %v1281
  %1730 = vmatprep.subr.mxu0 0.0
  %1731 = vmatpush1.msra.mxu0 %v1280
  %1732 = vmatprep.subr.mxu0 0.0
  %1733 = vmatpush1.msra.mxu0 %v1279
  %1734 = vmatprep.subr.mxu0 0.0
  %1735 = vmatpush1.msra.mxu0 %v1278
  %1736 = vmatprep.subr.mxu0 0.0
  %1737 = vmatpush1.msra.mxu0 %v1277
  %1738 = vmatprep.subr.mxu0 0.0
  %1739 = vmatpush1.msra.mxu0 %v1276
  %1740 = vmatprep.subr.mxu0 0.0
  %1741 = vmatpush1.msra.mxu0 %v1275
  %1742 = vmatprep.subr.mxu0 0.0
  %1743 = vmatpush1.msra.mxu0 %v1274
  %1744 = vmatprep.subr.mxu0 0.0
  %1745 = vmatpush1.msra.mxu0 %v1273
  %1746 = vmatprep.subr.mxu0 0.0
  %1747 = vmatpush1.msra.mxu0 %v1272
  %1748 = vmatprep.subr.mxu0 0.0
  %1749 = vmatpush1.msra.mxu0 %v1271
  %1750 = vmatprep.subr.mxu0 0.0
  %1751 = vmatpush1.msra.mxu0 %v1270
  %1752 = vmatprep.subr.mxu0 0.0
  %1753 = vmatpush1.msra.mxu0 %v1269
  %1754 = vmatprep.subr.mxu0 0.0
  %1755 = vmatpush2.msra.mxu0 %v1300
  %1756 = vmatprep.subr.mxu0 0.0
  %1757 = vmatpush2.msra.mxu0 %v1299
  %1758 = vmatprep.subr.mxu0 0.0
  %1759 = vmatpush2.msra.mxu0 %v1298
  %1760 = vmatprep.subr.mxu0 0.0
  %1761 = vmatpush2.msra.mxu0 %v1297
  %1762 = vmatprep.subr.mxu0 0.0
  %1763 = vmatpush2.msra.mxu0 %v1296
  %1764 = vmatprep.subr.mxu0 0.0
  %1765 = vmatpush2.msra.mxu0 %v1295
  %1766 = vmatprep.subr.mxu0 0.0
  %1767 = vmatpush2.msra.mxu0 %v1294
  %1768 = vmatprep.subr.mxu0 0.0
  %1769 = vmatpush2.msra.mxu0 %v1293
  %1770 = vmatprep.subr.mxu0 0.0
  %1771 = vmatpush2.msra.mxu0 %v1292
  %1772 = vmatprep.subr.mxu0 0.0
  %1773 = vmatpush2.msra.mxu0 %v1291
  %1774 = vmatprep.subr.mxu0 0.0
  %1775 = vmatpush2.msra.mxu0 %v1290
  %1776 = vmatprep.subr.mxu0 0.0
  %1777 = vmatpush2.msra.mxu0 %v1289
  %1778 = vmatprep.subr.mxu0 0.0
  %1779 = vmatpush2.msra.mxu0 %v1288
  %1780 = vmatprep.subr.mxu0 0.0
  %1781 = vmatpush2.msra.mxu0 %v1287
  %1782 = vmatprep.subr.mxu0 0.0
  %1783 = vmatpush2.msra.mxu0 %v1286
  %1784 = vmatprep.subr.mxu0 0.0
  %1785 = vmatpush2.msra.mxu0 %v1285
  %1786 = vmatprep.mubr.f32.mxu0 %v1104
  %1787 = vmatmul.mubr.f32.gmra.mxu0 %v1103
  %v1788 = vpop.f32.mrf.mxu0
  %v1789 = vadd.f32 %v1719, %v1788
  %v1790 = vpop.f32.mrf.mxu0
  %1791 = vdwg.mxu0
  %1792 = vmatprep.subr.mxu0 0.0
  %1793 = vmatpush1.msra.mxu0 %v1316
  %1794 = vmatprep.subr.mxu0 0.0
  %1795 = vmatpush1.msra.mxu0 %v1315
  %1796 = vmatprep.subr.mxu0 0.0
  %1797 = vmatpush1.msra.mxu0 %v1314
  %1798 = vmatprep.subr.mxu0 0.0
  %1799 = vmatpush1.msra.mxu0 %v1313
  %1800 = vmatprep.subr.mxu0 0.0
  %1801 = vmatpush1.msra.mxu0 %v1312
  %1802 = vmatprep.subr.mxu0 0.0
  %1803 = vmatpush1.msra.mxu0 %v1311
  %1804 = vmatprep.subr.mxu0 0.0
  %1805 = vmatpush1.msra.mxu0 %v1310
  %1806 = vmatprep.subr.mxu0 0.0
  %1807 = vmatpush1.msra.mxu0 %v1309
  %1808 = vmatprep.subr.mxu0 0.0
  %1809 = vmatpush1.msra.mxu0 %v1308
  %1810 = vmatprep.subr.mxu0 0.0
  %1811 = vmatpush1.msra.mxu0 %v1307
  %1812 = vmatprep.subr.mxu0 0.0
  %1813 = vmatpush1.msra.mxu0 %v1306
  %1814 = vmatprep.subr.mxu0 0.0
  %1815 = vmatpush1.msra.mxu0 %v1305
  %1816 = vmatprep.subr.mxu0 0.0
  %1817 = vmatpush1.msra.mxu0 %v1304
  %1818 = vmatprep.subr.mxu0 0.0
  %1819 = vmatpush1.msra.mxu0 %v1303
  %1820 = vmatprep.subr.mxu0 0.0
  %1821 = vmatpush1.msra.mxu0 %v1302
  %1822 = vmatprep.subr.mxu0 0.0
  %1823 = vmatpush1.msra.mxu0 %v1301
  %1824 = vmatprep.subr.mxu0 0.0
  %1825 = vmatpush2.msra.mxu0 %v1332
  %1826 = vmatprep.subr.mxu0 0.0
  %1827 = vmatpush2.msra.mxu0 %v1331
  %1828 = vmatprep.subr.mxu0 0.0
  %1829 = vmatpush2.msra.mxu0 %v1330
  %1830 = vmatprep.subr.mxu0 0.0
  %1831 = vmatpush2.msra.mxu0 %v1329
  %1832 = vmatprep.subr.mxu0 0.0
  %1833 = vmatpush2.msra.mxu0 %v1328
  %1834 = vmatprep.subr.mxu0 0.0
  %1835 = vmatpush2.msra.mxu0 %v1327
  %1836 = vmatprep.subr.mxu0 0.0
  %1837 = vmatpush2.msra.mxu0 %v1326
  %1838 = vmatprep.subr.mxu0 0.0
  %1839 = vmatpush2.msra.mxu0 %v1325
  %1840 = vmatprep.subr.mxu0 0.0
  %1841 = vmatpush2.msra.mxu0 %v1324
  %1842 = vmatprep.subr.mxu0 0.0
  %1843 = vmatpush2.msra.mxu0 %v1323
  %1844 = vmatprep.subr.mxu0 0.0
  %1845 = vmatpush2.msra.mxu0 %v1322
  %1846 = vmatprep.subr.mxu0 0.0
  %1847 = vmatpush2.msra.mxu0 %v1321
  %1848 = vmatprep.subr.mxu0 0.0
  %1849 = vmatpush2.msra.mxu0 %v1320
  %1850 = vmatprep.subr.mxu0 0.0
  %1851 = vmatpush2.msra.mxu0 %v1319
  %1852 = vmatprep.subr.mxu0 0.0
  %1853 = vmatpush2.msra.mxu0 %v1318
  %1854 = vmatprep.subr.mxu0 0.0
  %1855 = vmatpush2.msra.mxu0 %v1317
  %1856 = vmatprep.mubr.f32.mxu0 %v1106
  %1857 = vmatmul.mubr.f32.gmra.mxu0 %v1105
  %v1858 = vpop.f32.mrf.mxu0
  %v1859 = vadd.f32 %v1789, %v1858
  %v1860 = vpop.f32.mrf.mxu0
  %1861 = vdwg.mxu0
  %1862 = vmatprep.subr.mxu0 0.0
  %1863 = vmatpush1.msra.mxu0 %v1348
  %1864 = vmatprep.subr.mxu0 0.0
  %1865 = vmatpush1.msra.mxu0 %v1347
  %1866 = vmatprep.subr.mxu0 0.0
  %1867 = vmatpush1.msra.mxu0 %v1346
  %1868 = vmatprep.subr.mxu0 0.0
  %1869 = vmatpush1.msra.mxu0 %v1345
  %1870 = vmatprep.subr.mxu0 0.0
  %1871 = vmatpush1.msra.mxu0 %v1344
  %1872 = vmatprep.subr.mxu0 0.0
  %1873 = vmatpush1.msra.mxu0 %v1343
  %1874 = vmatprep.subr.mxu0 0.0
  %1875 = vmatpush1.msra.mxu0 %v1342
  %1876 = vmatprep.subr.mxu0 0.0
  %1877 = vmatpush1.msra.mxu0 %v1341
  %1878 = vmatprep.subr.mxu0 0.0
  %1879 = vmatpush1.msra.mxu0 %v1340
  %1880 = vmatprep.subr.mxu0 0.0
  %1881 = vmatpush1.msra.mxu0 %v1339
  %1882 = vmatprep.subr.mxu0 0.0
  %1883 = vmatpush1.msra.mxu0 %v1338
  %1884 = vmatprep.subr.mxu0 0.0
  %1885 = vmatpush1.msra.mxu0 %v1337
  %1886 = vmatprep.subr.mxu0 0.0
  %1887 = vmatpush1.msra.mxu0 %v1336
  %1888 = vmatprep.subr.mxu0 0.0
  %1889 = vmatpush1.msra.mxu0 %v1335
  %1890 = vmatprep.subr.mxu0 0.0
  %1891 = vmatpush1.msra.mxu0 %v1334
  %1892 = vmatprep.subr.mxu0 0.0
  %1893 = vmatpush1.msra.mxu0 %v1333
  %1894 = vmatprep.subr.mxu0 0.0
  %1895 = vmatpush2.msra.mxu0 %v1364
  %1896 = vmatprep.subr.mxu0 0.0
  %1897 = vmatpush2.msra.mxu0 %v1363
  %1898 = vmatprep.subr.mxu0 0.0
  %1899 = vmatpush2.msra.mxu0 %v1362
  %1900 = vmatprep.subr.mxu0 0.0
  %1901 = vmatpush2.msra.mxu0 %v1361
  %1902 = vmatprep.subr.mxu0 0.0
  %1903 = vmatpush2.msra.mxu0 %v1360
  %1904 = vmatprep.subr.mxu0 0.0
  %1905 = vmatpush2.msra.mxu0 %v1359
  %1906 = vmatprep.subr.mxu0 0.0
  %1907 = vmatpush2.msra.mxu0 %v1358
  %1908 = vmatprep.subr.mxu0 0.0
  %1909 = vmatpush2.msra.mxu0 %v1357
  %1910 = vmatprep.subr.mxu0 0.0
  %1911 = vmatpush2.msra.mxu0 %v1356
  %1912 = vmatprep.subr.mxu0 0.0
  %1913 = vmatpush2.msra.mxu0 %v1355
  %1914 = vmatprep.subr.mxu0 0.0
  %1915 = vmatpush2.msra.mxu0 %v1354
  %1916 = vmatprep.subr.mxu0 0.0
  %1917 = vmatpush2.msra.mxu0 %v1353
  %1918 = vmatprep.subr.mxu0 0.0
  %1919 = vmatpush2.msra.mxu0 %v1352
  %1920 = vmatprep.subr.mxu0 0.0
  %1921 = vmatpush2.msra.mxu0 %v1351
  %1922 = vmatprep.subr.mxu0 0.0
  %1923 = vmatpush2.msra.mxu0 %v1350
  %1924 = vmatprep.subr.mxu0 0.0
  %1925 = vmatpush2.msra.mxu0 %v1349
  %1926 = vmatprep.mubr.f32.mxu0 %v1108
  %1927 = vmatmul.mubr.f32.gmra.mxu0 %v1107
  %v1928 = vpop.f32.mrf.mxu0
  %v1929 = vadd.f32 %v1859, %v1928
  %v1930 = vpop.f32.mrf.mxu0
  %1931 = vdwg.mxu0
  %1932 = vst [vmem:[%s7] sm:$0xff] %v1929
  // Predicated region
  $region30: #{mnist_forward.1} parent=0 // pred_check
    _
  $region31: #{mnist_forward.1} parent=0 // pred_check_branch
    %1934 = sbr.rel (0) target = $region33
  $region32: #{mnist_forward.1} parent=0 // pred_region
    _
  $region33: #{mnist_forward.1} parent=0 // pred_fallthru
    _
  // Predicated region
  $region34: #{mnist_forward.1} parent=0 // pred_check
    _
  $region35: #{mnist_forward.1} parent=0 // pred_check_branch
    %1936 = sbr.rel (0) target = $region37
  $region36: #{mnist_forward.1} parent=0 // pred_region
    _
  $region37: #{mnist_forward.1} parent=0 // pred_fallthru
    _

</llo_original>
